<compile_context>
chip_gen: v6e
topology: v6e:2x2x1
jax: 0.10.0
libtpu: 0.0.40
codegen_flags: <defaults>
</compile_context>

<pallas_src>
import functools

import jax
import jax.numpy as jnp
from jax.experimental import pallas as pl
from jax.experimental.pallas import tpu as pltpu

LANE = 128
SUB_BF16 = 16  # bf16 packs 16 rows per vreg tile


def _round_up(x, m):
    return (x + m - 1) // m * m


def _pad2(x, rows, cols):
    return jnp.pad(x, ((0, rows - x.shape[0]), (0, cols - x.shape[1])))


# ----------------------------------------------------------------------------
# Fused Pallas kernel: conv1 -> ReLU -> conv2 -> per-graph mean -> fc
# ----------------------------------------------------------------------------
def _rgcn_fused_kernel(a_ref, x_ref, w1_ref, b1_ref, w2_ref, b2_ref,
                       mr_ref, fcw_ref, fcb_ref, o_ref, xw_ref,
                       *, num_rels, n_pad):
    hp = b1_ref.shape[1]                 # padded hidden dim (multiple of 128)
    op = b2_ref.shape[1]                 # padded output dim (multiple of 128)
    rn = num_rels * n_pad                # real K extent of the aggregation matmul
    rnp, wmax = xw_ref.shape

    # Zero ONLY the padded K rows (>= R*Np), once.  Real rows are fully overwritten
    # in both layers, so this single narrow store covers the whole kernel.
    if rnp > rn:
        xw_ref[pl.ds(rn, rnp - rn), :] = jnp.zeros((rnp - rn, wmax), xw_ref.dtype)

    # ---- Layer 1: h1 = relu(sum_r A_r @ (X @ W1_r) + b1) ---------------------------------
    # One hcat matmul covers all relations; restack column slices as K row-blocks.
    z1 = jnp.dot(x_ref[...], w1_ref[...],
                 preferred_element_type=jnp.float32).astype(jnp.bfloat16)  # (Np, R*hp)
    for r in range(num_rels):            # static unroll; lane/sublane-aligned block stores
        xw_ref[pl.ds(r * n_pad, n_pad), pl.ds(0, hp)] = z1[:, r * hp:(r + 1) * hp]
    h1 = jnp.dot(a_ref[...], xw_ref[:, pl.ds(0, hp)],
                 preferred_element_type=jnp.float32)
    h1 = jnp.maximum(h1 + b1_ref[...], 0.0)

    # ---- Layer 2: h2 = sum_r A_r @ (h1 @ W2_r) + b2 ---------------------------------------
    z2 = jnp.dot(h1.astype(jnp.bfloat16), w2_ref[...],
                 preferred_element_type=jnp.float32).astype(jnp.bfloat16)  # (Np, R*op)
    for r in range(num_rels):
        xw_ref[pl.ds(r * n_pad, n_pad), pl.ds(0, op)] = z2[:, r * op:(r + 1) * op]
    h2 = jnp.dot(a_ref[...], xw_ref[:, pl.ds(0, op)],
                 preferred_element_type=jnp.float32)
    h2 = h2 + b2_ref[...]
    # TODO(synk): F.dropout(h, 0.5, training=self.training) — identity in eval mode.

    # ---- Readout: logits = fc(mean_nodes(h2)) per graph -----------------------------------
    # mr_ref[b, v] = 1/|V_b| for v in graph b, else 0  (f32 for exact mean weights).
    hg = jnp.dot(mr_ref[...], h2, preferred_element_type=jnp.float32)      # (Bp, op)
    logits = jnp.dot(hg.astype(jnp.bfloat16), fcw_ref[...],
                     preferred_element_type=jnp.float32) + fcb_ref[...]
    o_ref[...] = logits.astype(o_ref.dtype)                                # lane-dense store


# ----------------------------------------------------------------------------
# One-time parameter glue (hoisted off the per-call path)
# ----------------------------------------------------------------------------
def prepare_params(params):
    """Fold the basis regularizer, pad to lane-dense layout, cast matmul operands to bf16."""
    num_rels = params["coeff1"].shape[0]
    in_dim, h_dim = params["basis1"].shape[1:]
    out_dim = params["basis2"].shape[2]
    ip, hp, op, fcp = (_round_up(d, LANE) for d in (in_dim, h_dim, out_dim, 2))

    # Basis regularizer: W_r = sum_b coeff[r, b] * V[b]
    w1 = jnp.einsum("rb,bio->rio", params["coeff1"], params["basis1"])   # (R, in, h)
    w2 = jnp.einsum("rb,bio->rio", params["coeff2"], params["basis2"])   # (R, h, out)

    def hcat(w, rows, cols):
        # (R, i, o) -> (rows, R*cols) with column block r == padded W_r.
        wp = jnp.pad(w, ((0, 0), (0, rows - w.shape[1]), (0, cols - w.shape[2])))
        return jnp.transpose(wp, (1, 0, 2)).reshape(rows, w.shape[0] * cols)

    return {
        "w1": hcat(w1, ip, hp).astype(jnp.bfloat16),
        "w2": hcat(w2, hp, op).astype(jnp.bfloat16),
        "b1": _pad2(params["bias1"].reshape(1, -1), 1, hp),
        "b2": _pad2(params["bias2"].reshape(1, -1), 1, op),
        "fcw": _pad2(params["fc_w"].T, op, fcp).astype(jnp.bfloat16),     # (out_dim, 2) padded
        "fcb": _pad2(params["fc_b"].reshape(1, -1), 1, fcp),
    }


# ----------------------------------------------------------------------------
# Forward (jitted): builds block-diagonal A_cat + readout matrix, calls the kernel
# ----------------------------------------------------------------------------
@functools.partial(jax.jit, static_argnames=("num_graphs", "num_rels"))
def rgcn_forward(prepared, features, src, dst, etypes, node_graph_id, *,
                 num_graphs, num_rels):
    """features: (N_total, in_dim); src/dst/etypes: (E,) global ids of the batched graph;
    node_graph_id: (N_total,) graph membership. Returns (num_graphs, 2) logits."""
    n_total, in_dim = features.shape
    ip = prepared["w1"].shape[0]
    hp = prepared["b1"].shape[1]
    op = prepared["b2"].shape[1]
    fcp = prepared["fcb"].shape[1]
    assert in_dim <= ip

    n_pad = _round_up(max(n_total, SUB_BF16), SUB_BF16)   # bf16 sublane-tile aligned rows
    bp = _round_up(max(num_graphs, 8), 8)
    rn = num_rels * n_pad
    rnp = _round_up(rn, LANE)                             # padded K of the aggregation matmul

    # Block-diagonal batched adjacency built directly in the padded lane-dense layout:
    # A_cat[v, r*Np + u] = #edges (u -> v) of relation r.
    a_cat = jnp.zeros((n_pad, rnp), jnp.float32)
    a_cat = a_cat.at[dst, etypes * n_pad + src].add(1.0).astype(jnp.bfloat16)

    x_p = _pad2(features, n_pad, ip).astype(jnp.bfloat16)

    # Per-graph mean-nodes readout matrix (padded graphs/nodes get zero weight).
    sel = jnp.zeros((bp, n_pad), jnp.float32)
    sel = sel.at[node_graph_id, jnp.arange(n_total)].set(1.0)
    counts = jnp.maximum(jnp.sum(sel, axis=1, keepdims=True), 1.0)
    mread = sel / counts

    kernel = functools.partial(_rgcn_fused_kernel, num_rels=num_rels, n_pad=n_pad)

    flops = 2 * (n_pad * ip * num_rels * hp + n_pad * rnp * hp +
                 n_pad * hp * num_rels * op + n_pad * rnp * op +
                 bp * n_pad * op + bp * op * fcp)
    bytes_accessed = (2 * (n_pad * rnp + n_pad * ip + ip * num_rels * hp +
                           hp * num_rels * op + op * fcp) +
                      4 * (hp + op + bp * n_pad + fcp + bp * fcp))

    out = pl.pallas_call(
        kernel,
        out_shape=jax.ShapeDtypeStruct((bp, fcp), jnp.float32),
        grid_spec=pltpu.PrefetchScalarGridSpec(
            num_scalar_prefetch=0,
            grid=(1,),
            in_specs=[
                pl.BlockSpec((n_pad, rnp), lambda i: (0, 0)),              # A_cat
                pl.BlockSpec((n_pad, ip), lambda i: (0, 0)),               # X
                pl.BlockSpec((ip, num_rels * hp), lambda i: (0, 0)),       # W1 hcat
                pl.BlockSpec((1, hp), lambda i: (0, 0)),                   # b1
                pl.BlockSpec((hp, num_rels * op), lambda i: (0, 0)),       # W2 hcat
                pl.BlockSpec((1, op), lambda i: (0, 0)),                   # b2
                pl.BlockSpec((bp, n_pad), lambda i: (0, 0)),               # readout matrix
                pl.BlockSpec((op, fcp), lambda i: (0, 0)),                 # fc weight^T (bf16)
                pl.BlockSpec((1, fcp), lambda i: (0, 0)),                  # fc bias
            ],
            out_specs=pl.BlockSpec((bp, fcp), lambda i: (0, 0)),
            scratch_shapes=[pltpu.VMEM((rnp, max(hp, op)), jnp.bfloat16)],  # XW row-stack
        ),
        compiler_params=pltpu.CompilerParams(dimension_semantics=("arbitrary",)),
        cost_estimate=pl.CostEstimate(flops=int(flops), transcendentals=0,
                                      bytes_accessed=int(bytes_accessed)),
    )(a_cat, x_p, prepared["w1"], prepared["b1"], prepared["w2"], prepared["b2"],
      mread, prepared["fcw"], prepared["fcb"])

    return out[:num_graphs, :2]


# ----------------------------------------------------------------------------
# Deterministic setup + run
# ----------------------------------------------------------------------------
def _init_params(key, in_dim, h_dim, out_dim, num_rels):
    ks = jax.random.split(key, 8)
    num_bases = num_rels  # num_bases = num_rels per the module
    return {
        "basis1": 0.1 * jax.random.normal(ks[0], (num_bases, in_dim, h_dim), jnp.float32),
        "coeff1": 0.1 * jax.random.normal(ks[1], (num_rels, num_bases), jnp.float32),
        "bias1": 0.1 * jax.random.normal(ks[2], (h_dim,), jnp.float32),
        "basis2": 0.1 * jax.random.normal(ks[3], (num_bases, h_dim, out_dim), jnp.float32),
        "coeff2": 0.1 * jax.random.normal(ks[4], (num_rels, num_bases), jnp.float32),
        "bias2": 0.1 * jax.random.normal(ks[5], (out_dim,), jnp.float32),
        "fc_w": 0.1 * jax.random.normal(ks[6], (2, out_dim), jnp.float32),  # nn.Linear(out,2)
        "fc_b": 0.1 * jax.random.normal(ks[7], (2,), jnp.float32),
    }


if __name__ == "__main__":
    # Small shapes consistent with the module; 8 graphs batched block-diagonally
    # (disjoint union, same as dgl.batch) so every matmul has M = 128 rows.
    NUM_GRAPHS = 8
    NODES_PER_GRAPH = 16
    EDGES_PER_GRAPH = 48
    IN_DIM = 8
    H_DIM = 16
    OUT_DIM = 8
    NUM_RELS = 3

    n_total = NUM_GRAPHS * NODES_PER_GRAPH
    n_edges = NUM_GRAPHS * EDGES_PER_GRAPH

    key = jax.random.PRNGKey(0)
    k_feat, k_src, k_dst, k_et, k_par = jax.random.split(key, 5)

    features = jax.random.normal(k_feat, (n_total, IN_DIM), jnp.float32)
    offs = jnp.repeat(jnp.arange(NUM_GRAPHS) * NODES_PER_GRAPH, EDGES_PER_GRAPH)
    src = jax.random.randint(k_src, (n_edges,), 0, NODES_PER_GRAPH) + offs
    dst = jax.random.randint(k_dst, (n_edges,), 0, NODES_PER_GRAPH) + offs
    etypes = jax.random.randint(k_et, (n_edges,), 0, NUM_RELS)
    node_graph_id = jnp.repeat(jnp.arange(NUM_GRAPHS), NODES_PER_GRAPH)

    params = _init_params(k_par, IN_DIM, H_DIM, OUT_DIM, NUM_RELS)
    prepared = prepare_params(params)   # one-time parameter glue, reused across calls

    logits = rgcn_forward(prepared, features, src, dst, etypes, node_graph_id,
                          num_graphs=NUM_GRAPHS, num_rels=NUM_RELS)
    jax.block_until_ready(logits)
    assert logits.shape == (NUM_GRAPHS, 2) and logits.dtype == jnp.float32
    print("KERNEL_OK")
</pallas_src>

<mosaic_0001>
module attributes {stable_mosaic.version = 11 : i64} {
  func.func private @main(%arg0: i32) attributes {dimension_semantics = [#tpu.dimension_semantics<core_parallel>], iteration_bounds = array<i64: 2>, tpu.core_type = #tpu.core_type<sc_scalar_subcore>, window_params = []} {
    return
  }
}

module attributes {stable_mosaic.version = 11 : i64} {
  func.func private @main(%arg0: i32) attributes {dimension_semantics = [#tpu.dimension_semantics<core_parallel>], iteration_bounds = array<i64: 2>, tpu.core_type = #tpu.core_type<sc_scalar_subcore>, window_params = []} {
    return
  }
}

module attributes {stable_mosaic.version = 11 : i64} {
  func.func @_rgcn_fused_kernel(%arg0: i32, %arg1: memref<128x384xbf16, #tpu.memory_space<vmem>>, %arg2: memref<128x128xbf16, #tpu.memory_space<vmem>>, %arg3: memref<128x384xbf16, #tpu.memory_space<vmem>>, %arg4: memref<1x128xf32, #tpu.memory_space<vmem>>, %arg5: memref<128x384xbf16, #tpu.memory_space<vmem>>, %arg6: memref<1x128xf32, #tpu.memory_space<vmem>>, %arg7: memref<8x128xf32, #tpu.memory_space<vmem>>, %arg8: memref<128x128xbf16, #tpu.memory_space<vmem>>, %arg9: memref<1x128xf32, #tpu.memory_space<vmem>>, %arg10: memref<8x128xf32, #tpu.memory_space<vmem>>, %arg11: memref<384x128xbf16, #tpu.memory_space<vmem>>) attributes {dimension_semantics = [#tpu.dimension_semantics<arbitrary>], iteration_bounds = array<i64: 1>, scalar_prefetch = 0 : i64, scratch_operands = 1 : i64, tpu.core_type = #tpu.core_type<tc>, window_params = [{pipeline_mode = #tpu.pipeline_mode<synchronous>, transform_indices = @transform_0, window_bounds = array<i64: 128, 384>}, {pipeline_mode = #tpu.pipeline_mode<synchronous>, transform_indices = @transform_1, window_bounds = array<i64: 128, 128>}, {pipeline_mode = #tpu.pipeline_mode<synchronous>, transform_indices = @transform_2, window_bounds = array<i64: 128, 384>}, {pipeline_mode = #tpu.pipeline_mode<synchronous>, transform_indices = @transform_3, window_bounds = array<i64: 1, 128>}, {pipeline_mode = #tpu.pipeline_mode<synchronous>, transform_indices = @transform_4, window_bounds = array<i64: 128, 384>}, {pipeline_mode = #tpu.pipeline_mode<synchronous>, transform_indices = @transform_5, window_bounds = array<i64: 1, 128>}, {pipeline_mode = #tpu.pipeline_mode<synchronous>, transform_indices = @transform_6, window_bounds = array<i64: 8, 128>}, {pipeline_mode = #tpu.pipeline_mode<synchronous>, transform_indices = @transform_7, window_bounds = array<i64: 128, 128>}, {pipeline_mode = #tpu.pipeline_mode<synchronous>, transform_indices = @transform_8, window_bounds = array<i64: 1, 128>}, {pipeline_mode = #tpu.pipeline_mode<synchronous>, transform_indices = @transform_9, window_bounds = array<i64: 8, 128>}]} {
    %c0 = arith.constant 0 : index
    %c0_0 = arith.constant 0 : index
    %0 = vector.load %arg2[%c0, %c0_0] : memref<128x128xbf16, #tpu.memory_space<vmem>>, vector<128x128xbf16>
    %c0_1 = arith.constant 0 : index
    %c0_2 = arith.constant 0 : index
    %1 = vector.load %arg3[%c0_1, %c0_2] : memref<128x384xbf16, #tpu.memory_space<vmem>>, vector<128x384xbf16>
    %cst = arith.constant dense<0.000000e+00> : vector<128x384xf32>
    %2 = tpu.matmul %0, %1, %cst {dimension_numbers = #tpu.dot_dimension_numbers<[1], [0], [0], [1], [0, 0, 1, 1], [], []>} : vector<128x128xbf16>, vector<128x384xbf16>, vector<128x384xf32> -> vector<128x384xf32>
    %3 = arith.truncf %2 : vector<128x384xf32> to vector<128x384xbf16>
    %4 = vector.extract_strided_slice %3 {offsets = [0, 0], sizes = [128, 128], strides = [1, 1]} : vector<128x384xbf16> to vector<128x128xbf16>
    %c0_3 = arith.constant 0 : index
    %c0_4 = arith.constant 0 : index
    %5 = vector.load %arg11[%c0_3, %c0_4] : memref<384x128xbf16, #tpu.memory_space<vmem>>, vector<128x128xbf16>
    tpu.vector_store %arg11[%c0_3, %c0_4], %4 {strides = array<i32>} : memref<384x128xbf16, #tpu.memory_space<vmem>>, vector<128x128xbf16>,
    %6 = vector.extract_strided_slice %3 {offsets = [0, 128], sizes = [128, 128], strides = [1, 1]} : vector<128x384xbf16> to vector<128x128xbf16>
    %c128 = arith.constant 128 : index
    %c0_5 = arith.constant 0 : index
    %7 = vector.load %arg11[%c128, %c0_5] : memref<384x128xbf16, #tpu.memory_space<vmem>>, vector<128x128xbf16>
    tpu.vector_store %arg11[%c128, %c0_5], %6 {strides = array<i32>} : memref<384x128xbf16, #tpu.memory_space<vmem>>, vector<128x128xbf16>,
    %8 = vector.extract_strided_slice %3 {offsets = [0, 256], sizes = [128, 128], strides = [1, 1]} : vector<128x384xbf16> to vector<128x128xbf16>
    %c256 = arith.constant 256 : index
    %c0_6 = arith.constant 0 : index
    %9 = vector.load %arg11[%c256, %c0_6] : memref<384x128xbf16, #tpu.memory_space<vmem>>, vector<128x128xbf16>
    tpu.vector_store %arg11[%c256, %c0_6], %8 {strides = array<i32>} : memref<384x128xbf16, #tpu.memory_space<vmem>>, vector<128x128xbf16>,
    %c0_7 = arith.constant 0 : index
    %c0_8 = arith.constant 0 : index
    %10 = vector.load %arg1[%c0_7, %c0_8] : memref<128x384xbf16, #tpu.memory_space<vmem>>, vector<128x384xbf16>
    %c0_9 = arith.constant 0 : index
    %c0_10 = arith.constant 0 : index
    %11 = vector.load %arg11[%c0_9, %c0_10] : memref<384x128xbf16, #tpu.memory_space<vmem>>, vector<384x128xbf16>
    %cst_11 = arith.constant dense<0.000000e+00> : vector<128x128xf32>
    %12 = tpu.matmul %10, %11, %cst_11 {dimension_numbers = #tpu.dot_dimension_numbers<[1], [0], [0], [1], [0, 0, 1, 1], [], []>} : vector<128x384xbf16>, vector<384x128xbf16>, vector<128x128xf32> -> vector<128x128xf32>
    %c0_12 = arith.constant 0 : index
    %c0_13 = arith.constant 0 : index
    %13 = vector.load %arg4[%c0_12, %c0_13] : memref<1x128xf32, #tpu.memory_space<vmem>>, vector<1x128xf32>
    %14 = vector.broadcast %13 : vector<1x128xf32> to vector<128x128xf32>
    %15 = arith.addf %12, %14 : vector<128x128xf32>
    %cst_14 = arith.constant 0.000000e+00 : f32
    %16 = vector.broadcast %cst_14 : f32 to vector<128x128xf32>
    %17 = arith.maximumf %15, %16 : vector<128x128xf32>
    %18 = arith.truncf %17 : vector<128x128xf32> to vector<128x128xbf16>
    %c0_15 = arith.constant 0 : index
    %c0_16 = arith.constant 0 : index
    %19 = vector.load %arg5[%c0_15, %c0_16] : memref<128x384xbf16, #tpu.memory_space<vmem>>, vector<128x384xbf16>
    %cst_17 = arith.constant dense<0.000000e+00> : vector<128x384xf32>
    %20 = tpu.matmul %18, %19, %cst_17 {dimension_numbers = #tpu.dot_dimension_numbers<[1], [0], [0], [1], [0, 0, 1, 1], [], []>} : vector<128x128xbf16>, vector<128x384xbf16>, vector<128x384xf32> -> vector<128x384xf32>
    %21 = arith.truncf %20 : vector<128x384xf32> to vector<128x384xbf16>
    %22 = vector.extract_strided_slice %21 {offsets = [0, 0], sizes = [128, 128], strides = [1, 1]} : vector<128x384xbf16> to vector<128x128xbf16>
    %c0_18 = arith.constant 0 : index
    %c0_19 = arith.constant 0 : index
    %23 = vector.load %arg11[%c0_18, %c0_19] : memref<384x128xbf16, #tpu.memory_space<vmem>>, vector<128x128xbf16>
    tpu.vector_store %arg11[%c0_18, %c0_19], %22 {strides = array<i32>} : memref<384x128xbf16, #tpu.memory_space<vmem>>, vector<128x128xbf16>,
    %24 = vector.extract_strided_slice %21 {offsets = [0, 128], sizes = [128, 128], strides = [1, 1]} : vector<128x384xbf16> to vector<128x128xbf16>
    %c128_20 = arith.constant 128 : index
    %c0_21 = arith.constant 0 : index
    %25 = vector.load %arg11[%c128_20, %c0_21] : memref<384x128xbf16, #tpu.memory_space<vmem>>, vector<128x128xbf16>
    tpu.vector_store %arg11[%c128_20, %c0_21], %24 {strides = array<i32>} : memref<384x128xbf16, #tpu.memory_space<vmem>>, vector<128x128xbf16>,
    %26 = vector.extract_strided_slice %21 {offsets = [0, 256], sizes = [128, 128], strides = [1, 1]} : vector<128x384xbf16> to vector<128x128xbf16>
    %c256_22 = arith.constant 256 : index
    %c0_23 = arith.constant 0 : index
    %27 = vector.load %arg11[%c256_22, %c0_23] : memref<384x128xbf16, #tpu.memory_space<vmem>>, vector<128x128xbf16>
    tpu.vector_store %arg11[%c256_22, %c0_23], %26 {strides = array<i32>} : memref<384x128xbf16, #tpu.memory_space<vmem>>, vector<128x128xbf16>,
    %c0_24 = arith.constant 0 : index
    %c0_25 = arith.constant 0 : index
    %28 = vector.load %arg1[%c0_24, %c0_25] : memref<128x384xbf16, #tpu.memory_space<vmem>>, vector<128x384xbf16>
    %c0_26 = arith.constant 0 : index
    %c0_27 = arith.constant 0 : index
    %29 = vector.load %arg11[%c0_26, %c0_27] : memref<384x128xbf16, #tpu.memory_space<vmem>>, vector<384x128xbf16>
    %cst_28 = arith.constant dense<0.000000e+00> : vector<128x128xf32>
    %30 = tpu.matmul %28, %29, %cst_28 {dimension_numbers = #tpu.dot_dimension_numbers<[1], [0], [0], [1], [0, 0, 1, 1], [], []>} : vector<128x384xbf16>, vector<384x128xbf16>, vector<128x128xf32> -> vector<128x128xf32>
    %c0_29 = arith.constant 0 : index
    %c0_30 = arith.constant 0 : index
    %31 = vector.load %arg6[%c0_29, %c0_30] : memref<1x128xf32, #tpu.memory_space<vmem>>, vector<1x128xf32>
    %32 = vector.broadcast %31 : vector<1x128xf32> to vector<128x128xf32>
    %33 = arith.addf %30, %32 : vector<128x128xf32>
    %c0_31 = arith.constant 0 : index
    %c0_32 = arith.constant 0 : index
    %34 = vector.load %arg7[%c0_31, %c0_32] : memref<8x128xf32, #tpu.memory_space<vmem>>, vector<8x128xf32>
    %cst_33 = arith.constant dense<0.000000e+00> : vector<8x128xf32>
    %35 = tpu.matmul %34, %33, %cst_33 {dimension_numbers = #tpu.dot_dimension_numbers<[1], [0], [0], [1], [0, 0, 1, 1], [], []>} : vector<8x128xf32>, vector<128x128xf32>, vector<8x128xf32> -> vector<8x128xf32>
    %36 = arith.truncf %35 : vector<8x128xf32> to vector<8x128xbf16>
    %c0_34 = arith.constant 0 : index
    %c0_35 = arith.constant 0 : index
    %37 = vector.load %arg8[%c0_34, %c0_35] : memref<128x128xbf16, #tpu.memory_space<vmem>>, vector<128x128xbf16>
    %cst_36 = arith.constant dense<0.000000e+00> : vector<8x128xf32>
    %38 = tpu.matmul %36, %37, %cst_36 {dimension_numbers = #tpu.dot_dimension_numbers<[1], [0], [0], [1], [0, 0, 1, 1], [], []>} : vector<8x128xbf16>, vector<128x128xbf16>, vector<8x128xf32> -> vector<8x128xf32>
    %c0_37 = arith.constant 0 : index
    %c0_38 = arith.constant 0 : index
    %39 = vector.load %arg9[%c0_37, %c0_38] : memref<1x128xf32, #tpu.memory_space<vmem>>, vector<1x128xf32>
    %40 = vector.broadcast %39 : vector<1x128xf32> to vector<8x128xf32>
    %41 = arith.addf %38, %40 : vector<8x128xf32>
    %c0_39 = arith.constant 0 : index
    %c0_40 = arith.constant 0 : index
    %42 = vector.load %arg10[%c0_39, %c0_40] : memref<8x128xf32, #tpu.memory_space<vmem>>, vector<8x128xf32>
    tpu.vector_store %arg10[%c0_39, %c0_40], %41 {strides = array<i32>} : memref<8x128xf32, #tpu.memory_space<vmem>>, vector<8x128xf32>,
    return
  }
  func.func @transform_0(%arg0: i32) -> (i32, i32) {
    %c0_i32 = arith.constant 0 : i32
    %c0_i32_0 = arith.constant 0 : i32
    %c0_i32_1 = arith.constant 0 : i32
    return %c0_i32, %c0_i32_0 : i32, i32
  }
  func.func @transform_1(%arg0: i32) -> (i32, i32) {
    %c0_i32 = arith.constant 0 : i32
    %c0_i32_0 = arith.constant 0 : i32
    %c0_i32_1 = arith.constant 0 : i32
    return %c0_i32, %c0_i32_0 : i32, i32
  }
  func.func @transform_2(%arg0: i32) -> (i32, i32) {
    %c0_i32 = arith.constant 0 : i32
    %c0_i32_0 = arith.constant 0 : i32
    %c0_i32_1 = arith.constant 0 : i32
    return %c0_i32, %c0_i32_0 : i32, i32
  }
  func.func @transform_3(%arg0: i32) -> (i32, i32) {
    %c0_i32 = arith.constant 0 : i32
    %c0_i32_0 = arith.constant 0 : i32
    %c0_i32_1 = arith.constant 0 : i32
    return %c0_i32, %c0_i32_0 : i32, i32
  }
  func.func @transform_4(%arg0: i32) -> (i32, i32) {
    %c0_i32 = arith.constant 0 : i32
    %c0_i32_0 = arith.constant 0 : i32
    %c0_i32_1 = arith.constant 0 : i32
    return %c0_i32, %c0_i32_0 : i32, i32
  }
  func.func @transform_5(%arg0: i32) -> (i32, i32) {
    %c0_i32 = arith.constant 0 : i32
    %c0_i32_0 = arith.constant 0 : i32
    %c0_i32_1 = arith.constant 0 : i32
    return %c0_i32, %c0_i32_0 : i32, i32
  }
  func.func @transform_6(%arg0: i32) -> (i32, i32) {
    %c0_i32 = arith.constant 0 : i32
    %c0_i32_0 = arith.constant 0 : i32
    %c0_i32_1 = arith.constant 0 : i32
    return %c0_i32, %c0_i32_0 : i32, i32
  }
  func.func @transform_7(%arg0: i32) -> (i32, i32) {
    %c0_i32 = arith.constant 0 : i32
    %c0_i32_0 = arith.constant 0 : i32
    %c0_i32_1 = arith.constant 0 : i32
    return %c0_i32, %c0_i32_0 : i32, i32
  }
  func.func @transform_8(%arg0: i32) -> (i32, i32) {
    %c0_i32 = arith.constant 0 : i32
    %c0_i32_0 = arith.constant 0 : i32
    %c0_i32_1 = arith.constant 0 : i32
    return %c0_i32, %c0_i32_0 : i32, i32
  }
  func.func @transform_9(%arg0: i32) -> (i32, i32) {
    %c0_i32 = arith.constant 0 : i32
    %c0_i32_0 = arith.constant 0 : i32
    %c0_i32_1 = arith.constant 0 : i32
    return %c0_i32, %c0_i32_0 : i32, i32
  }
}

</mosaic_0001>

<llo_original>
// kernel: rgcn_forward.1
$region0: #{rgcn_forward.1}
  #allocation0 [shape = 'u32[]', space=smem, size = 0x4, offset = 0x4, fixed_abs, tag = 'smem constant byte address 0x4 - core index']
  #allocation1 [shape = 'u32[144,128]{1,0:T(1,128)}', space=vmem, size = 0x12000, scoped, tag = 'internal scratch']
  #allocation2 [shape = 'bf16[384,128]{1,0:T(8,128)(2,1)}', space=vmem, size = 0x18000, scoped, tag = 'scratch operand']
  %s0 = inlined_call_operand.vmem [shape: bf16[128,384], index: 0, kind: input, shape index: {}]
  %s1 = inlined_call_operand.vmem [shape: bf16[128,128], index: 1, kind: input, shape index: {}]
  %s2 = inlined_call_operand.vmem [shape: bf16[128,384], index: 2, kind: input, shape index: {}]
  %s3 = inlined_call_operand.vmem [shape: f32[1,128], index: 3, kind: input, shape index: {}]
  %s4 = inlined_call_operand.vmem [shape: bf16[128,384], index: 4, kind: input, shape index: {}]
  %s5 = inlined_call_operand.vmem [shape: f32[1,128], index: 5, kind: input, shape index: {}]
  %s6 = inlined_call_operand.vmem [shape: f32[8,128], index: 6, kind: input, shape index: {}]
  %s7 = inlined_call_operand.vmem [shape: bf16[128,128], index: 7, kind: input, shape index: {}]
  %s8 = inlined_call_operand.vmem [shape: f32[1,128], index: 8, kind: input, shape index: {}]
  %s9 = inlined_call_operand.vmem [shape: f32[8,128], index: 9, kind: output, shape index: {}]
  %s10 = sld [smem:[#allocation0]]
  $region46: #{rgcn_forward.1} parent=0
    _
  %s12 = ssub.s32 1, %s10
  %s13 = scalar_select 0, %s12, %s10
  // Predicated region
  $region2: #{rgcn_forward.1} parent=0 // pred_check
    _
  $region3: #{rgcn_forward.1} parent=0 // pred_check_branch
    %15 = sbr.rel (0) target = $region5
  $region4: #{rgcn_forward.1} parent=0 // pred_region
    _
  $region5: #{rgcn_forward.1} parent=0 // pred_fallthru
    _
  // Predicated region
  $region6: #{rgcn_forward.1} parent=0 // pred_check
    _
  $region7: #{rgcn_forward.1} parent=0 // pred_check_branch
    %17 = sbr.rel (0) target = $region9
  $region8: #{rgcn_forward.1} parent=0 // pred_region
    _
  $region9: #{rgcn_forward.1} parent=0 // pred_fallthru
    _
  // Predicated region
  $region10: #{rgcn_forward.1} parent=0 // pred_check
    _
  $region11: #{rgcn_forward.1} parent=0 // pred_check_branch
    %19 = sbr.rel (0) target = $region13
  $region12: #{rgcn_forward.1} parent=0 // pred_region
    _
  $region13: #{rgcn_forward.1} parent=0 // pred_fallthru
    _
  // Predicated region
  $region14: #{rgcn_forward.1} parent=0 // pred_check
    _
  $region15: #{rgcn_forward.1} parent=0 // pred_check_branch
    %21 = sbr.rel (0) target = $region17
  $region16: #{rgcn_forward.1} parent=0 // pred_region
    _
  $region17: #{rgcn_forward.1} parent=0 // pred_fallthru
    _
  // Predicated region
  $region18: #{rgcn_forward.1} parent=0 // pred_check
    _
  $region19: #{rgcn_forward.1} parent=0 // pred_check_branch
    %23 = sbr.rel (0) target = $region21
  $region20: #{rgcn_forward.1} parent=0 // pred_region
    _
  $region21: #{rgcn_forward.1} parent=0 // pred_fallthru
    _
  // Predicated region
  $region22: #{rgcn_forward.1} parent=0 // pred_check
    _
  $region23: #{rgcn_forward.1} parent=0 // pred_check_branch
    %25 = sbr.rel (0) target = $region25
  $region24: #{rgcn_forward.1} parent=0 // pred_region
    _
  $region25: #{rgcn_forward.1} parent=0 // pred_fallthru
    _
  // Predicated region
  $region26: #{rgcn_forward.1} parent=0 // pred_check
    _
  $region27: #{rgcn_forward.1} parent=0 // pred_check_branch
    %27 = sbr.rel (0) target = $region29
  $region28: #{rgcn_forward.1} parent=0 // pred_region
    _
  $region29: #{rgcn_forward.1} parent=0 // pred_fallthru
    _
  // Predicated region
  $region30: #{rgcn_forward.1} parent=0 // pred_check
    _
  $region31: #{rgcn_forward.1} parent=0 // pred_check_branch
    %29 = sbr.rel (0) target = $region33
  $region32: #{rgcn_forward.1} parent=0 // pred_region
    _
  $region33: #{rgcn_forward.1} parent=0 // pred_fallthru
    _
  // Predicated region
  $region34: #{rgcn_forward.1} parent=0 // pred_check
    _
  $region35: #{rgcn_forward.1} parent=0 // pred_check_branch
    %31 = sbr.rel (0) target = $region37
  $region36: #{rgcn_forward.1} parent=0 // pred_region
    _
  $region37: #{rgcn_forward.1} parent=0 // pred_fallthru
    _
  %v33 = vld [vmem:[%s1] sm:$0xf]
  %v34 = vld [vmem:[%s1 + $0x4] sm:$0xf]
  %v35 = vld [vmem:[%s1 + $0x8] sm:$0xf]
  %v36 = vld [vmem:[%s1 + $0xc] sm:$0xf]
  %v37 = vld [vmem:[%s1 + $0x10] sm:$0xf]
  %v38 = vld [vmem:[%s1 + $0x14] sm:$0xf]
  %v39 = vld [vmem:[%s1 + $0x18] sm:$0xf]
  %v40 = vld [vmem:[%s1 + $0x1c] sm:$0xf]
  %v41 = vld [vmem:[%s1 + $0x20] sm:$0xf]
  %v42 = vld [vmem:[%s1 + $0x24] sm:$0xf]
  %v43 = vld [vmem:[%s1 + $0x28] sm:$0xf]
  %v44 = vld [vmem:[%s1 + $0x2c] sm:$0xf]
  %v45 = vld [vmem:[%s1 + $0x30] sm:$0xf]
  %v46 = vld [vmem:[%s1 + $0x34] sm:$0xf]
  %v47 = vld [vmem:[%s1 + $0x38] sm:$0xf]
  %v48 = vld [vmem:[%s1 + $0x3c] sm:$0xf]
  %v49 = vld [vmem:[%s2] sm:$0xff]
  %v50 = vld [vmem:[%s2 + $0x8] sm:$0xf]
  %v51 = vld [vmem:[%s2 + $0xc] sm:$0xff]
  %v52 = vld [vmem:[%s2 + $0x14] sm:$0xf]
  %v53 = vld [vmem:[%s2 + $0x18] sm:$0xff]
  %v54 = vld [vmem:[%s2 + $0x20] sm:$0xf]
  %v55 = vld [vmem:[%s2 + $0x24] sm:$0xff]
  %v56 = vld [vmem:[%s2 + $0x2c] sm:$0xf]
  %v57 = vld [vmem:[%s2 + $0x30] sm:$0xff]
  %v58 = vld [vmem:[%s2 + $0x38] sm:$0xf]
  %v59 = vld [vmem:[%s2 + $0x3c] sm:$0xff]
  %v60 = vld [vmem:[%s2 + $0x44] sm:$0xf]
  %v61 = vld [vmem:[%s2 + $0x48] sm:$0xff]
  %v62 = vld [vmem:[%s2 + $0x50] sm:$0xf]
  %v63 = vld [vmem:[%s2 + $0x54] sm:$0xff]
  %v64 = vld [vmem:[%s2 + $0x5c] sm:$0xf]
  %v65 = vld [vmem:[%s2 + $0x60] sm:$0xff]
  %v66 = vld [vmem:[%s2 + $0x68] sm:$0xf]
  %v67 = vld [vmem:[%s2 + $0x6c] sm:$0xff]
  %v68 = vld [vmem:[%s2 + $0x74] sm:$0xf]
  %v69 = vld [vmem:[%s2 + $0x78] sm:$0xff]
  %v70 = vld [vmem:[%s2 + $0x80] sm:$0xf]
  %v71 = vld [vmem:[%s2 + $0x84] sm:$0xff]
  %v72 = vld [vmem:[%s2 + $0x8c] sm:$0xf]
  %v73 = vld [vmem:[%s2 + $0x90] sm:$0xff]
  %v74 = vld [vmem:[%s2 + $0x98] sm:$0xf]
  %v75 = vld [vmem:[%s2 + $0x9c] sm:$0xff]
  %v76 = vld [vmem:[%s2 + $0xa4] sm:$0xf]
  %v77 = vld [vmem:[%s2 + $0xa8] sm:$0xff]
  %v78 = vld [vmem:[%s2 + $0xb0] sm:$0xf]
  %v79 = vld [vmem:[%s2 + $0xb4] sm:$0xff]
  %v80 = vld [vmem:[%s2 + $0xbc] sm:$0xf]
  %v97 = vunpack.c.l.b16 %v33
  %v98 = vunpack.c.l.b16 %v34
  %v99 = vunpack.c.l.b16 %v35
  %v100 = vunpack.c.l.b16 %v36
  %v101 = vunpack.c.l.b16 %v37
  %v102 = vunpack.c.l.b16 %v38
  %v103 = vunpack.c.l.b16 %v39
  %v104 = vunpack.c.l.b16 %v40
  %v105 = vunpack.c.l.b16 %v41
  %v106 = vunpack.c.l.b16 %v42
  %v107 = vunpack.c.l.b16 %v43
  %v108 = vunpack.c.l.b16 %v44
  %v109 = vunpack.c.l.b16 %v45
  %v110 = vunpack.c.l.b16 %v46
  %v111 = vunpack.c.l.b16 %v47
  %v112 = vunpack.c.l.b16 %v48
  %v113 = vpack.c.b16 %v98, %v97
  %v114 = vpack.c.b16 %v100, %v99
  %v115 = vpack.c.b16 %v102, %v101
  %v116 = vpack.c.b16 %v104, %v103
  %v117 = vpack.c.b16 %v106, %v105
  %v118 = vpack.c.b16 %v108, %v107
  %v119 = vpack.c.b16 %v110, %v109
  %v120 = vpack.c.b16 %v112, %v111
  %v161 = vunpack.c.l.b16 %v49
  %v162 = vunpack.c.h.b16 %v49
  %v163 = vunpack.c.l.b16 %v50
  %v164 = vunpack.c.l.b16 %v51
  %v165 = vunpack.c.h.b16 %v51
  %v166 = vunpack.c.l.b16 %v52
  %v167 = vunpack.c.l.b16 %v53
  %v168 = vunpack.c.h.b16 %v53
  %v169 = vunpack.c.l.b16 %v54
  %v170 = vunpack.c.l.b16 %v55
  %v171 = vunpack.c.h.b16 %v55
  %v172 = vunpack.c.l.b16 %v56
  %v173 = vunpack.c.l.b16 %v57
  %v174 = vunpack.c.h.b16 %v57
  %v175 = vunpack.c.l.b16 %v58
  %v176 = vunpack.c.l.b16 %v59
  %v177 = vunpack.c.h.b16 %v59
  %v178 = vunpack.c.l.b16 %v60
  %v179 = vunpack.c.l.b16 %v61
  %v180 = vunpack.c.h.b16 %v61
  %v181 = vunpack.c.l.b16 %v62
  %v182 = vunpack.c.l.b16 %v63
  %v183 = vunpack.c.h.b16 %v63
  %v184 = vunpack.c.l.b16 %v64
  %v185 = vunpack.c.l.b16 %v65
  %v186 = vunpack.c.h.b16 %v65
  %v187 = vunpack.c.l.b16 %v66
  %v188 = vunpack.c.l.b16 %v67
  %v189 = vunpack.c.h.b16 %v67
  %v190 = vunpack.c.l.b16 %v68
  %v191 = vunpack.c.l.b16 %v69
  %v192 = vunpack.c.h.b16 %v69
  %v193 = vunpack.c.l.b16 %v70
  %v194 = vunpack.c.l.b16 %v71
  %v195 = vunpack.c.h.b16 %v71
  %v196 = vunpack.c.l.b16 %v72
  %v197 = vunpack.c.l.b16 %v73
  %v198 = vunpack.c.h.b16 %v73
  %v199 = vunpack.c.l.b16 %v74
  %v200 = vunpack.c.l.b16 %v75
  %v201 = vunpack.c.h.b16 %v75
  %v202 = vunpack.c.l.b16 %v76
  %v203 = vunpack.c.l.b16 %v77
  %v204 = vunpack.c.h.b16 %v77
  %v205 = vunpack.c.l.b16 %v78
  %v206 = vunpack.c.l.b16 %v79
  %v207 = vunpack.c.h.b16 %v79
  %v208 = vunpack.c.l.b16 %v80
  %v209 = vpack.c.b16 %v164, %v161
  %v210 = vpack.c.b16 %v165, %v162
  %v211 = vpack.c.b16 %v166, %v163
  %v212 = vpack.c.b16 %v170, %v167
  %v213 = vpack.c.b16 %v171, %v168
  %v214 = vpack.c.b16 %v172, %v169
  %v215 = vpack.c.b16 %v176, %v173
  %v216 = vpack.c.b16 %v177, %v174
  %v217 = vpack.c.b16 %v178, %v175
  %v218 = vpack.c.b16 %v182, %v179
  %v219 = vpack.c.b16 %v183, %v180
  %v220 = vpack.c.b16 %v184, %v181
  %v221 = vpack.c.b16 %v188, %v185
  %v222 = vpack.c.b16 %v189, %v186
  %v223 = vpack.c.b16 %v190, %v187
  %v224 = vpack.c.b16 %v194, %v191
  %v225 = vpack.c.b16 %v195, %v192
  %v226 = vpack.c.b16 %v196, %v193
  %v227 = vpack.c.b16 %v200, %v197
  %v228 = vpack.c.b16 %v201, %v198
  %v229 = vpack.c.b16 %v202, %v199
  %v230 = vpack.c.b16 %v206, %v203
  %v231 = vpack.c.b16 %v207, %v204
  %v232 = vpack.c.b16 %v208, %v205
  %257 = vmatprep.subr.bf16.mxu0 %v231
  %258 = vmatpush1.bf16.msra.mxu0 %v230
  %259 = vmatprep.subr.bf16.mxu0 %v228
  %260 = vmatpush1.bf16.msra.mxu0 %v227
  %261 = vmatprep.subr.bf16.mxu0 %v225
  %262 = vmatpush1.bf16.msra.mxu0 %v224
  %263 = vmatprep.subr.bf16.mxu0 %v222
  %264 = vmatpush1.bf16.msra.mxu0 %v221
  %265 = vmatprep.subr.bf16.mxu0 %v219
  %266 = vmatpush1.bf16.msra.mxu0 %v218
  %267 = vmatprep.subr.bf16.mxu0 %v216
  %268 = vmatpush1.bf16.msra.mxu0 %v215
  %269 = vmatprep.subr.bf16.mxu0 %v213
  %270 = vmatpush1.bf16.msra.mxu0 %v212
  %271 = vmatprep.subr.bf16.mxu0 %v210
  %272 = vmatpush1.bf16.msra.mxu0 %v209
  %273 = vmatprep.subr.bf16.mxu0 0
  %274 = vmatpush2.bf16.msra.mxu0 0
  %275 = vmatprep.subr.bf16.mxu0 0
  %276 = vmatpush2.bf16.msra.mxu0 0
  %277 = vmatprep.subr.bf16.mxu0 0
  %278 = vmatpush2.bf16.msra.mxu0 0
  %279 = vmatprep.subr.bf16.mxu0 0
  %280 = vmatpush2.bf16.msra.mxu0 0
  %281 = vmatprep.subr.bf16.mxu0 0
  %282 = vmatpush2.bf16.msra.mxu0 0
  %283 = vmatprep.subr.bf16.mxu0 0
  %284 = vmatpush2.bf16.msra.mxu0 0
  %285 = vmatprep.subr.bf16.mxu0 0
  %286 = vmatpush2.bf16.msra.mxu0 0
  %287 = vmatprep.subr.bf16.mxu0 0
  %288 = vmatpush2.bf16.msra.mxu0 0
  %289 = vmatprep.mubr.bf16.mxu0 0
  %290 = vmatmul.mubr.bf16.gmra.mxu0 %v113
  %v291 = vpop.f32.mrf.mxu0
  %v292 = vadd.f32 0.0, %v291
  %v293 = vpop.f32.mrf.mxu0
  %v294 = vadd.f32 0.0, %v293
  %v295 = vpop.f32.mrf.mxu0
  %v296 = vadd.f32 0.0, %v295
  %v297 = vpop.f32.mrf.mxu0
  %v298 = vadd.f32 0.0, %v297
  %299 = vmatprep.mubr.bf16.mxu0 0
  %300 = vmatmul.mubr.bf16.gmra.mxu0 %v114
  %v301 = vpop.f32.mrf.mxu0
  %v302 = vadd.f32 0.0, %v301
  %v303 = vpop.f32.mrf.mxu0
  %v304 = vadd.f32 0.0, %v303
  %v305 = vpop.f32.mrf.mxu0
  %v306 = vadd.f32 0.0, %v305
  %v307 = vpop.f32.mrf.mxu0
  %v308 = vadd.f32 0.0, %v307
  %309 = vmatprep.mubr.bf16.mxu0 0
  %310 = vmatmul.mubr.bf16.gmra.mxu0 %v115
  %v311 = vpop.f32.mrf.mxu0
  %v312 = vadd.f32 0.0, %v311
  %v313 = vpop.f32.mrf.mxu0
  %v314 = vadd.f32 0.0, %v313
  %v315 = vpop.f32.mrf.mxu0
  %v316 = vadd.f32 0.0, %v315
  %v317 = vpop.f32.mrf.mxu0
  %v318 = vadd.f32 0.0, %v317
  %319 = vmatprep.mubr.bf16.mxu0 0
  %320 = vmatmul.mubr.bf16.gmra.mxu0 %v116
  %v321 = vpop.f32.mrf.mxu0
  %v322 = vadd.f32 0.0, %v321
  %v323 = vpop.f32.mrf.mxu0
  %v324 = vadd.f32 0.0, %v323
  %v325 = vpop.f32.mrf.mxu0
  %v326 = vadd.f32 0.0, %v325
  %v327 = vpop.f32.mrf.mxu0
  %v328 = vadd.f32 0.0, %v327
  %329 = vmatprep.mubr.bf16.mxu0 0
  %330 = vmatmul.mubr.bf16.gmra.mxu0 %v117
  %v331 = vpop.f32.mrf.mxu0
  %v332 = vadd.f32 0.0, %v331
  %v333 = vpop.f32.mrf.mxu0
  %v334 = vadd.f32 0.0, %v333
  %v335 = vpop.f32.mrf.mxu0
  %v336 = vadd.f32 0.0, %v335
  %v337 = vpop.f32.mrf.mxu0
  %v338 = vadd.f32 0.0, %v337
  %339 = vmatprep.mubr.bf16.mxu0 0
  %340 = vmatmul.mubr.bf16.gmra.mxu0 %v118
  %v341 = vpop.f32.mrf.mxu0
  %v342 = vadd.f32 0.0, %v341
  %v343 = vpop.f32.mrf.mxu0
  %v344 = vadd.f32 0.0, %v343
  %v345 = vpop.f32.mrf.mxu0
  %v346 = vadd.f32 0.0, %v345
  %v347 = vpop.f32.mrf.mxu0
  %v348 = vadd.f32 0.0, %v347
  %349 = vmatprep.mubr.bf16.mxu0 0
  %350 = vmatmul.mubr.bf16.gmra.mxu0 %v119
  %v351 = vpop.f32.mrf.mxu0
  %v352 = vadd.f32 0.0, %v351
  %v353 = vpop.f32.mrf.mxu0
  %v354 = vadd.f32 0.0, %v353
  %v355 = vpop.f32.mrf.mxu0
  %v356 = vadd.f32 0.0, %v355
  %v357 = vpop.f32.mrf.mxu0
  %v358 = vadd.f32 0.0, %v357
  %359 = vmatprep.mubr.bf16.mxu0 0
  %360 = vmatmul.mubr.bf16.gmra.mxu0 %v120
  %v361 = vpop.f32.mrf.mxu0
  %v362 = vadd.f32 0.0, %v361
  %v363 = vpop.f32.mrf.mxu0
  %v364 = vadd.f32 0.0, %v363
  %v365 = vpop.f32.mrf.mxu0
  %v366 = vadd.f32 0.0, %v365
  %v367 = vpop.f32.mrf.mxu0
  %v368 = vadd.f32 0.0, %v367
  %369 = vdwg.mxu0
  %370 = vmatprep.subr.bf16.mxu0 0
  %371 = vmatpush1.bf16.msra.mxu0 %v232
  %372 = vmatprep.subr.bf16.mxu0 0
  %373 = vmatpush1.bf16.msra.mxu0 %v229
  %374 = vmatprep.subr.bf16.mxu0 0
  %375 = vmatpush1.bf16.msra.mxu0 %v226
  %376 = vmatprep.subr.bf16.mxu0 0
  %377 = vmatpush1.bf16.msra.mxu0 %v223
  %378 = vmatprep.subr.bf16.mxu0 0
  %379 = vmatpush1.bf16.msra.mxu0 %v220
  %380 = vmatprep.subr.bf16.mxu0 0
  %381 = vmatpush1.bf16.msra.mxu0 %v217
  %382 = vmatprep.subr.bf16.mxu0 0
  %383 = vmatpush1.bf16.msra.mxu0 %v214
  %384 = vmatprep.subr.bf16.mxu0 0
  %385 = vmatpush1.bf16.msra.mxu0 %v211
  %386 = vmatprep.subr.bf16.mxu0 0
  %387 = vmatpush2.bf16.msra.mxu0 0
  %388 = vmatprep.subr.bf16.mxu0 0
  %389 = vmatpush2.bf16.msra.mxu0 0
  %390 = vmatprep.subr.bf16.mxu0 0
  %391 = vmatpush2.bf16.msra.mxu0 0
  %392 = vmatprep.subr.bf16.mxu0 0
  %393 = vmatpush2.bf16.msra.mxu0 0
  %394 = vmatprep.subr.bf16.mxu0 0
  %395 = vmatpush2.bf16.msra.mxu0 0
  %396 = vmatprep.subr.bf16.mxu0 0
  %397 = vmatpush2.bf16.msra.mxu0 0
  %398 = vmatprep.subr.bf16.mxu0 0
  %399 = vmatpush2.bf16.msra.mxu0 0
  %400 = vmatprep.subr.bf16.mxu0 0
  %401 = vmatpush2.bf16.msra.mxu0 0
  %402 = vmatprep.mubr.bf16.mxu0 0
  %403 = vmatmul.mubr.bf16.gmra.mxu0 %v113
  %v404 = vpop.f32.mrf.mxu0
  %v405 = vadd.f32 0.0, %v404
  %v406 = vpop.f32.mrf.mxu0
  %v407 = vpop.f32.mrf.mxu0
  %v408 = vadd.f32 0.0, %v407
  %v409 = vpop.f32.mrf.mxu0
  %410 = vmatprep.mubr.bf16.mxu0 0
  %411 = vmatmul.mubr.bf16.gmra.mxu0 %v114
  %v412 = vpop.f32.mrf.mxu0
  %v413 = vadd.f32 0.0, %v412
  %v414 = vpop.f32.mrf.mxu0
  %v415 = vpop.f32.mrf.mxu0
  %v416 = vadd.f32 0.0, %v415
  %v417 = vpop.f32.mrf.mxu0
  %418 = vmatprep.mubr.bf16.mxu0 0
  %419 = vmatmul.mubr.bf16.gmra.mxu0 %v115
  %v420 = vpop.f32.mrf.mxu0
  %v421 = vadd.f32 0.0, %v420
  %v422 = vpop.f32.mrf.mxu0
  %v423 = vpop.f32.mrf.mxu0
  %v424 = vadd.f32 0.0, %v423
  %v425 = vpop.f32.mrf.mxu0
  %426 = vmatprep.mubr.bf16.mxu0 0
  %427 = vmatmul.mubr.bf16.gmra.mxu0 %v116
  %v428 = vpop.f32.mrf.mxu0
  %v429 = vadd.f32 0.0, %v428
  %v430 = vpop.f32.mrf.mxu0
  %v431 = vpop.f32.mrf.mxu0
  %v432 = vadd.f32 0.0, %v431
  %v433 = vpop.f32.mrf.mxu0
  %434 = vmatprep.mubr.bf16.mxu0 0
  %435 = vmatmul.mubr.bf16.gmra.mxu0 %v117
  %v436 = vpop.f32.mrf.mxu0
  %v437 = vadd.f32 0.0, %v436
  %v438 = vpop.f32.mrf.mxu0
  %v439 = vpop.f32.mrf.mxu0
  %v440 = vadd.f32 0.0, %v439
  %v441 = vpop.f32.mrf.mxu0
  %442 = vmatprep.mubr.bf16.mxu0 0
  %443 = vmatmul.mubr.bf16.gmra.mxu0 %v118
  %v444 = vpop.f32.mrf.mxu0
  %v445 = vadd.f32 0.0, %v444
  %v446 = vpop.f32.mrf.mxu0
  %v447 = vpop.f32.mrf.mxu0
  %v448 = vadd.f32 0.0, %v447
  %v449 = vpop.f32.mrf.mxu0
  %450 = vmatprep.mubr.bf16.mxu0 0
  %451 = vmatmul.mubr.bf16.gmra.mxu0 %v119
  %v452 = vpop.f32.mrf.mxu0
  %v453 = vadd.f32 0.0, %v452
  %v454 = vpop.f32.mrf.mxu0
  %v455 = vpop.f32.mrf.mxu0
  %v456 = vadd.f32 0.0, %v455
  %v457 = vpop.f32.mrf.mxu0
  %458 = vmatprep.mubr.bf16.mxu0 0
  %459 = vmatmul.mubr.bf16.gmra.mxu0 %v120
  %v460 = vpop.f32.mrf.mxu0
  %v461 = vadd.f32 0.0, %v460
  %v462 = vpop.f32.mrf.mxu0
  %v463 = vpop.f32.mrf.mxu0
  %v464 = vadd.f32 0.0, %v463
  %v465 = vpop.f32.mrf.mxu0
  %466 = vdwg.mxu0
  %v467 = vpack.c.bf16 %v296, %v292
  %v468 = vpack.c.bf16 %v298, %v294
  %v469 = vpack.c.bf16 %v408, %v405
  %v470 = vpack.c.bf16 %v306, %v302
  %v471 = vpack.c.bf16 %v308, %v304
  %v472 = vpack.c.bf16 %v416, %v413
  %v473 = vpack.c.bf16 %v316, %v312
  %v474 = vpack.c.bf16 %v318, %v314
  %v475 = vpack.c.bf16 %v424, %v421
  %v476 = vpack.c.bf16 %v326, %v322
  %v477 = vpack.c.bf16 %v328, %v324
  %v478 = vpack.c.bf16 %v432, %v429
  %v479 = vpack.c.bf16 %v336, %v332
  %v480 = vpack.c.bf16 %v338, %v334
  %v481 = vpack.c.bf16 %v440, %v437
  %v482 = vpack.c.bf16 %v346, %v342
  %v483 = vpack.c.bf16 %v348, %v344
  %v484 = vpack.c.bf16 %v448, %v445
  %v485 = vpack.c.bf16 %v356, %v352
  %v486 = vpack.c.bf16 %v358, %v354
  %v487 = vpack.c.bf16 %v456, %v453
  %v488 = vpack.c.bf16 %v366, %v362
  %v489 = vpack.c.bf16 %v368, %v364
  %v490 = vpack.c.bf16 %v464, %v461
  %v499 = vunpack.c.l.b16 %v467
  %v500 = vunpack.c.h.b16 %v467
  %v501 = vunpack.c.l.b16 %v470
  %v502 = vunpack.c.h.b16 %v470
  %v503 = vunpack.c.l.b16 %v473
  %v504 = vunpack.c.h.b16 %v473
  %v505 = vunpack.c.l.b16 %v476
  %v506 = vunpack.c.h.b16 %v476
  %v507 = vunpack.c.l.b16 %v479
  %v508 = vunpack.c.h.b16 %v479
  %v509 = vunpack.c.l.b16 %v482
  %v510 = vunpack.c.h.b16 %v482
  %v511 = vunpack.c.l.b16 %v485
  %v512 = vunpack.c.h.b16 %v485
  %v513 = vunpack.c.l.b16 %v488
  %v514 = vunpack.c.h.b16 %v488
  %v515 = vpack.c.b16 %v499, %v499
  %v516 = vpack.c.b16 %v500, %v500
  %v517 = vpack.c.b16 %v501, %v501
  %v518 = vpack.c.b16 %v502, %v502
  %v519 = vpack.c.b16 %v503, %v503
  %v520 = vpack.c.b16 %v504, %v504
  %v521 = vpack.c.b16 %v505, %v505
  %v522 = vpack.c.b16 %v506, %v506
  %v523 = vpack.c.b16 %v507, %v507
  %v524 = vpack.c.b16 %v508, %v508
  %v525 = vpack.c.b16 %v509, %v509
  %v526 = vpack.c.b16 %v510, %v510
  %v527 = vpack.c.b16 %v511, %v511
  %v528 = vpack.c.b16 %v512, %v512
  %v529 = vpack.c.b16 %v513, %v513
  %v530 = vpack.c.b16 %v514, %v514
  %547 = vst [vmem:[#allocation2] sm:$0xf] %v515
  %548 = vst [vmem:[#allocation2 + $0x4] sm:$0xf] %v516
  %549 = vst [vmem:[#allocation2 + $0x8] sm:$0xf] %v517
  %550 = vst [vmem:[#allocation2 + $0xc] sm:$0xf] %v518
  %551 = vst [vmem:[#allocation2 + $0x10] sm:$0xf] %v519
  %552 = vst [vmem:[#allocation2 + $0x14] sm:$0xf] %v520
  %553 = vst [vmem:[#allocation2 + $0x18] sm:$0xf] %v521
  %554 = vst [vmem:[#allocation2 + $0x1c] sm:$0xf] %v522
  %555 = vst [vmem:[#allocation2 + $0x20] sm:$0xf] %v523
  %556 = vst [vmem:[#allocation2 + $0x24] sm:$0xf] %v524
  %557 = vst [vmem:[#allocation2 + $0x28] sm:$0xf] %v525
  %558 = vst [vmem:[#allocation2 + $0x2c] sm:$0xf] %v526
  %559 = vst [vmem:[#allocation2 + $0x30] sm:$0xf] %v527
  %560 = vst [vmem:[#allocation2 + $0x34] sm:$0xf] %v528
  %561 = vst [vmem:[#allocation2 + $0x38] sm:$0xf] %v529
  %562 = vst [vmem:[#allocation2 + $0x3c] sm:$0xf] %v530
  %v571 = vunpack.c.l.b16 %v468
  %v572 = vunpack.c.h.b16 %v468
  %v573 = vunpack.c.l.b16 %v471
  %v574 = vunpack.c.h.b16 %v471
  %v575 = vunpack.c.l.b16 %v474
  %v576 = vunpack.c.h.b16 %v474
  %v577 = vunpack.c.l.b16 %v477
  %v578 = vunpack.c.h.b16 %v477
  %v579 = vunpack.c.l.b16 %v480
  %v580 = vunpack.c.h.b16 %v480
  %v581 = vunpack.c.l.b16 %v483
  %v582 = vunpack.c.h.b16 %v483
  %v583 = vunpack.c.l.b16 %v486
  %v584 = vunpack.c.h.b16 %v486
  %v585 = vunpack.c.l.b16 %v489
  %v586 = vunpack.c.h.b16 %v489
  %v587 = vpack.c.b16 %v571, %v571
  %v588 = vpack.c.b16 %v572, %v572
  %v589 = vpack.c.b16 %v573, %v573
  %v590 = vpack.c.b16 %v574, %v574
  %v591 = vpack.c.b16 %v575, %v575
  %v592 = vpack.c.b16 %v576, %v576
  %v593 = vpack.c.b16 %v577, %v577
  %v594 = vpack.c.b16 %v578, %v578
  %v595 = vpack.c.b16 %v579, %v579
  %v596 = vpack.c.b16 %v580, %v580
  %v597 = vpack.c.b16 %v581, %v581
  %v598 = vpack.c.b16 %v582, %v582
  %v599 = vpack.c.b16 %v583, %v583
  %v600 = vpack.c.b16 %v584, %v584
  %v601 = vpack.c.b16 %v585, %v585
  %v602 = vpack.c.b16 %v586, %v586
  %619 = vst [vmem:[#allocation2 + $0x40] sm:$0xf] %v587
  %620 = vst [vmem:[#allocation2 + $0x44] sm:$0xf] %v588
  %621 = vst [vmem:[#allocation2 + $0x48] sm:$0xf] %v589
  %622 = vst [vmem:[#allocation2 + $0x4c] sm:$0xf] %v590
  %623 = vst [vmem:[#allocation2 + $0x50] sm:$0xf] %v591
  %624 = vst [vmem:[#allocation2 + $0x54] sm:$0xf] %v592
  %625 = vst [vmem:[#allocation2 + $0x58] sm:$0xf] %v593
  %626 = vst [vmem:[#allocation2 + $0x5c] sm:$0xf] %v594
  %627 = vst [vmem:[#allocation2 + $0x60] sm:$0xf] %v595
  %628 = vst [vmem:[#allocation2 + $0x64] sm:$0xf] %v596
  %629 = vst [vmem:[#allocation2 + $0x68] sm:$0xf] %v597
  %630 = vst [vmem:[#allocation2 + $0x6c] sm:$0xf] %v598
  %631 = vst [vmem:[#allocation2 + $0x70] sm:$0xf] %v599
  %632 = vst [vmem:[#allocation2 + $0x74] sm:$0xf] %v600
  %633 = vst [vmem:[#allocation2 + $0x78] sm:$0xf] %v601
  %634 = vst [vmem:[#allocation2 + $0x7c] sm:$0xf] %v602
  %v643 = vunpack.c.l.b16 %v469
  %v644 = vunpack.c.h.b16 %v469
  %v645 = vunpack.c.l.b16 %v472
  %v646 = vunpack.c.h.b16 %v472
  %v647 = vunpack.c.l.b16 %v475
  %v648 = vunpack.c.h.b16 %v475
  %v649 = vunpack.c.l.b16 %v478
  %v650 = vunpack.c.h.b16 %v478
  %v651 = vunpack.c.l.b16 %v481
  %v652 = vunpack.c.h.b16 %v481
  %v653 = vunpack.c.l.b16 %v484
  %v654 = vunpack.c.h.b16 %v484
  %v655 = vunpack.c.l.b16 %v487
  %v656 = vunpack.c.h.b16 %v487
  %v657 = vunpack.c.l.b16 %v490
  %v658 = vunpack.c.h.b16 %v490
  %v659 = vpack.c.b16 %v643, %v643
  %v660 = vpack.c.b16 %v644, %v644
  %v661 = vpack.c.b16 %v645, %v645
  %v662 = vpack.c.b16 %v646, %v646
  %v663 = vpack.c.b16 %v647, %v647
  %v664 = vpack.c.b16 %v648, %v648
  %v665 = vpack.c.b16 %v649, %v649
  %v666 = vpack.c.b16 %v650, %v650
  %v667 = vpack.c.b16 %v651, %v651
  %v668 = vpack.c.b16 %v652, %v652
  %v669 = vpack.c.b16 %v653, %v653
  %v670 = vpack.c.b16 %v654, %v654
  %v671 = vpack.c.b16 %v655, %v655
  %v672 = vpack.c.b16 %v656, %v656
  %v673 = vpack.c.b16 %v657, %v657
  %v674 = vpack.c.b16 %v658, %v658
  %691 = vst [vmem:[#allocation2 + $0x80] sm:$0xf] %v659
  %692 = vst [vmem:[#allocation2 + $0x84] sm:$0xf] %v660
  %693 = vst [vmem:[#allocation2 + $0x88] sm:$0xf] %v661
  %694 = vst [vmem:[#allocation2 + $0x8c] sm:$0xf] %v662
  %695 = vst [vmem:[#allocation2 + $0x90] sm:$0xf] %v663
  %696 = vst [vmem:[#allocation2 + $0x94] sm:$0xf] %v664
  %697 = vst [vmem:[#allocation2 + $0x98] sm:$0xf] %v665
  %698 = vst [vmem:[#allocation2 + $0x9c] sm:$0xf] %v666
  %699 = vst [vmem:[#allocation2 + $0xa0] sm:$0xf] %v667
  %700 = vst [vmem:[#allocation2 + $0xa4] sm:$0xf] %v668
  %701 = vst [vmem:[#allocation2 + $0xa8] sm:$0xf] %v669
  %702 = vst [vmem:[#allocation2 + $0xac] sm:$0xf] %v670
  %703 = vst [vmem:[#allocation2 + $0xb0] sm:$0xf] %v671
  %704 = vst [vmem:[#allocation2 + $0xb4] sm:$0xf] %v672
  %705 = vst [vmem:[#allocation2 + $0xb8] sm:$0xf] %v673
  %706 = vst [vmem:[#allocation2 + $0xbc] sm:$0xf] %v674
  %v707 = vld [vmem:[%s0] sm:$0xff]
  %v708 = vld [vmem:[%s0 + $0x8] sm:$0xf]
  %v709 = vld [vmem:[%s0 + $0xc] sm:$0xff]
  %v710 = vld [vmem:[%s0 + $0x14] sm:$0xf]
  %v711 = vld [vmem:[%s0 + $0x18] sm:$0xff]
  %v712 = vld [vmem:[%s0 + $0x20] sm:$0xf]
  %v713 = vld [vmem:[%s0 + $0x24] sm:$0xff]
  %v714 = vld [vmem:[%s0 + $0x2c] sm:$0xf]
  %v715 = vld [vmem:[%s0 + $0x30] sm:$0xff]
  %v716 = vld [vmem:[%s0 + $0x38] sm:$0xf]
  %v717 = vld [vmem:[%s0 + $0x3c] sm:$0xff]
  %v718 = vld [vmem:[%s0 + $0x44] sm:$0xf]
  %v719 = vld [vmem:[%s0 + $0x48] sm:$0xff]
  %v720 = vld [vmem:[%s0 + $0x50] sm:$0xf]
  %v721 = vld [vmem:[%s0 + $0x54] sm:$0xff]
  %v722 = vld [vmem:[%s0 + $0x5c] sm:$0xf]
  %v723 = vld [vmem:[%s0 + $0x60] sm:$0xff]
  %v724 = vld [vmem:[%s0 + $0x68] sm:$0xf]
  %v725 = vld [vmem:[%s0 + $0x6c] sm:$0xff]
  %v726 = vld [vmem:[%s0 + $0x74] sm:$0xf]
  %v727 = vld [vmem:[%s0 + $0x78] sm:$0xff]
  %v728 = vld [vmem:[%s0 + $0x80] sm:$0xf]
  %v729 = vld [vmem:[%s0 + $0x84] sm:$0xff]
  %v730 = vld [vmem:[%s0 + $0x8c] sm:$0xf]
  %v731 = vld [vmem:[%s0 + $0x90] sm:$0xff]
  %v732 = vld [vmem:[%s0 + $0x98] sm:$0xf]
  %v733 = vld [vmem:[%s0 + $0x9c] sm:$0xff]
  %v734 = vld [vmem:[%s0 + $0xa4] sm:$0xf]
  %v735 = vld [vmem:[%s0 + $0xa8] sm:$0xff]
  %v736 = vld [vmem:[%s0 + $0xb0] sm:$0xf]
  %v737 = vld [vmem:[%s0 + $0xb4] sm:$0xff]
  %v738 = vld [vmem:[%s0 + $0xbc] sm:$0xf]
  %v739 = vld [vmem:[#allocation2] sm:$0xf]
  %v740 = vld [vmem:[#allocation2 + $0x4] sm:$0xf]
  %v741 = vld [vmem:[#allocation2 + $0x8] sm:$0xf]
  %v742 = vld [vmem:[#allocation2 + $0xc] sm:$0xf]
  %v743 = vld [vmem:[#allocation2 + $0x10] sm:$0xf]
  %v744 = vld [vmem:[#allocation2 + $0x14] sm:$0xf]
  %v745 = vld [vmem:[#allocation2 + $0x18] sm:$0xf]
  %v746 = vld [vmem:[#allocation2 + $0x1c] sm:$0xf]
  %v747 = vld [vmem:[#allocation2 + $0x20] sm:$0xf]
  %v748 = vld [vmem:[#allocation2 + $0x24] sm:$0xf]
  %v749 = vld [vmem:[#allocation2 + $0x28] sm:$0xf]
  %v750 = vld [vmem:[#allocation2 + $0x2c] sm:$0xf]
  %v751 = vld [vmem:[#allocation2 + $0x30] sm:$0xf]
  %v752 = vld [vmem:[#allocation2 + $0x34] sm:$0xf]
  %v753 = vld [vmem:[#allocation2 + $0x38] sm:$0xf]
  %v754 = vld [vmem:[#allocation2 + $0x3c] sm:$0xf]
  %v755 = vld [vmem:[#allocation2 + $0x40] sm:$0xf]
  %v756 = vld [vmem:[#allocation2 + $0x44] sm:$0xf]
  %v757 = vld [vmem:[#allocation2 + $0x48] sm:$0xf]
  %v758 = vld [vmem:[#allocation2 + $0x4c] sm:$0xf]
  %v759 = vld [vmem:[#allocation2 + $0x50] sm:$0xf]
  %v760 = vld [vmem:[#allocation2 + $0x54] sm:$0xf]
  %v761 = vld [vmem:[#allocation2 + $0x58] sm:$0xf]
  %v762 = vld [vmem:[#allocation2 + $0x5c] sm:$0xf]
  %v763 = vld [vmem:[#allocation2 + $0x60] sm:$0xf]
  %v764 = vld [vmem:[#allocation2 + $0x64] sm:$0xf]
  %v765 = vld [vmem:[#allocation2 + $0x68] sm:$0xf]
  %v766 = vld [vmem:[#allocation2 + $0x6c] sm:$0xf]
  %v767 = vld [vmem:[#allocation2 + $0x70] sm:$0xf]
  %v768 = vld [vmem:[#allocation2 + $0x74] sm:$0xf]
  %v769 = vld [vmem:[#allocation2 + $0x78] sm:$0xf]
  %v770 = vld [vmem:[#allocation2 + $0x7c] sm:$0xf]
  %v771 = vld [vmem:[#allocation2 + $0x80] sm:$0xf]
  %v772 = vld [vmem:[#allocation2 + $0x84] sm:$0xf]
  %v773 = vld [vmem:[#allocation2 + $0x88] sm:$0xf]
  %v774 = vld [vmem:[#allocation2 + $0x8c] sm:$0xf]
  %v775 = vld [vmem:[#allocation2 + $0x90] sm:$0xf]
  %v776 = vld [vmem:[#allocation2 + $0x94] sm:$0xf]
  %v777 = vld [vmem:[#allocation2 + $0x98] sm:$0xf]
  %v778 = vld [vmem:[#allocation2 + $0x9c] sm:$0xf]
  %v779 = vld [vmem:[#allocation2 + $0xa0] sm:$0xf]
  %v780 = vld [vmem:[#allocation2 + $0xa4] sm:$0xf]
  %v781 = vld [vmem:[#allocation2 + $0xa8] sm:$0xf]
  %v782 = vld [vmem:[#allocation2 + $0xac] sm:$0xf]
  %v783 = vld [vmem:[#allocation2 + $0xb0] sm:$0xf]
  %v784 = vld [vmem:[#allocation2 + $0xb4] sm:$0xf]
  %v785 = vld [vmem:[#allocation2 + $0xb8] sm:$0xf]
  %v786 = vld [vmem:[#allocation2 + $0xbc] sm:$0xf]
  %v787 = vld [vmem:[%s3] sm:$0x1]
  %v789 = vlaneseq
  %v790 = vshrl.u32 %v789, 7
  %v791 = vsub.s32 0, %v790
  %v792 = vrot.slane %v787, %v791
  %v826 = vunpack.c.l.b16 %v707
  %v827 = vunpack.c.h.b16 %v707
  %v828 = vunpack.c.l.b16 %v708
  %v829 = vunpack.c.l.b16 %v709
  %v830 = vunpack.c.h.b16 %v709
  %v831 = vunpack.c.l.b16 %v710
  %v832 = vunpack.c.l.b16 %v711
  %v833 = vunpack.c.h.b16 %v711
  %v834 = vunpack.c.l.b16 %v712
  %v835 = vunpack.c.l.b16 %v713
  %v836 = vunpack.c.h.b16 %v713
  %v837 = vunpack.c.l.b16 %v714
  %v838 = vunpack.c.l.b16 %v715
  %v839 = vunpack.c.h.b16 %v715
  %v840 = vunpack.c.l.b16 %v716
  %v841 = vunpack.c.l.b16 %v717
  %v842 = vunpack.c.h.b16 %v717
  %v843 = vunpack.c.l.b16 %v718
  %v844 = vunpack.c.l.b16 %v719
  %v845 = vunpack.c.h.b16 %v719
  %v846 = vunpack.c.l.b16 %v720
  %v847 = vunpack.c.l.b16 %v721
  %v848 = vunpack.c.h.b16 %v721
  %v849 = vunpack.c.l.b16 %v722
  %v850 = vunpack.c.l.b16 %v723
  %v851 = vunpack.c.h.b16 %v723
  %v852 = vunpack.c.l.b16 %v724
  %v853 = vunpack.c.l.b16 %v725
  %v854 = vunpack.c.h.b16 %v725
  %v855 = vunpack.c.l.b16 %v726
  %v856 = vunpack.c.l.b16 %v727
  %v857 = vunpack.c.h.b16 %v727
  %v858 = vunpack.c.l.b16 %v728
  %v859 = vunpack.c.l.b16 %v729
  %v860 = vunpack.c.h.b16 %v729
  %v861 = vunpack.c.l.b16 %v730
  %v862 = vunpack.c.l.b16 %v731
  %v863 = vunpack.c.h.b16 %v731
  %v864 = vunpack.c.l.b16 %v732
  %v865 = vunpack.c.l.b16 %v733
  %v866 = vunpack.c.h.b16 %v733
  %v867 = vunpack.c.l.b16 %v734
  %v868 = vunpack.c.l.b16 %v735
  %v869 = vunpack.c.h.b16 %v735
  %v870 = vunpack.c.l.b16 %v736
  %v871 = vunpack.c.l.b16 %v737
  %v872 = vunpack.c.h.b16 %v737
  %v873 = vunpack.c.l.b16 %v738
  %v874 = vpack.c.b16 %v829, %v826
  %v875 = vpack.c.b16 %v830, %v827
  %v876 = vpack.c.b16 %v831, %v828
  %v877 = vpack.c.b16 %v835, %v832
  %v878 = vpack.c.b16 %v836, %v833
  %v879 = vpack.c.b16 %v837, %v834
  %v880 = vpack.c.b16 %v841, %v838
  %v881 = vpack.c.b16 %v842, %v839
  %v882 = vpack.c.b16 %v843, %v840
  %v883 = vpack.c.b16 %v847, %v844
  %v884 = vpack.c.b16 %v848, %v845
  %v885 = vpack.c.b16 %v849, %v846
  %v886 = vpack.c.b16 %v853, %v850
  %v887 = vpack.c.b16 %v854, %v851
  %v888 = vpack.c.b16 %v855, %v852
  %v889 = vpack.c.b16 %v859, %v856
  %v890 = vpack.c.b16 %v860, %v857
  %v891 = vpack.c.b16 %v861, %v858
  %v892 = vpack.c.b16 %v865, %v862
  %v893 = vpack.c.b16 %v866, %v863
  %v894 = vpack.c.b16 %v867, %v864
  %v895 = vpack.c.b16 %v871, %v868
  %v896 = vpack.c.b16 %v872, %v869
  %v897 = vpack.c.b16 %v873, %v870
  %v970 = vunpack.c.l.b16 %v739
  %v971 = vunpack.c.l.b16 %v740
  %v972 = vunpack.c.l.b16 %v741
  %v973 = vunpack.c.l.b16 %v742
  %v974 = vunpack.c.l.b16 %v743
  %v975 = vunpack.c.l.b16 %v744
  %v976 = vunpack.c.l.b16 %v745
  %v977 = vunpack.c.l.b16 %v746
  %v978 = vunpack.c.l.b16 %v747
  %v979 = vunpack.c.l.b16 %v748
  %v980 = vunpack.c.l.b16 %v749
  %v981 = vunpack.c.l.b16 %v750
  %v982 = vunpack.c.l.b16 %v751
  %v983 = vunpack.c.l.b16 %v752
  %v984 = vunpack.c.l.b16 %v753
  %v985 = vunpack.c.l.b16 %v754
  %v986 = vunpack.c.l.b16 %v755
  %v987 = vunpack.c.l.b16 %v756
  %v988 = vunpack.c.l.b16 %v757
  %v989 = vunpack.c.l.b16 %v758
  %v990 = vunpack.c.l.b16 %v759
  %v991 = vunpack.c.l.b16 %v760
  %v992 = vunpack.c.l.b16 %v761
  %v993 = vunpack.c.l.b16 %v762
  %v994 = vunpack.c.l.b16 %v763
  %v995 = vunpack.c.l.b16 %v764
  %v996 = vunpack.c.l.b16 %v765
  %v997 = vunpack.c.l.b16 %v766
  %v998 = vunpack.c.l.b16 %v767
  %v999 = vunpack.c.l.b16 %v768
  %v1000 = vunpack.c.l.b16 %v769
  %v1001 = vunpack.c.l.b16 %v770
  %v1002 = vunpack.c.l.b16 %v771
  %v1003 = vunpack.c.l.b16 %v772
  %v1004 = vunpack.c.l.b16 %v773
  %v1005 = vunpack.c.l.b16 %v774
  %v1006 = vunpack.c.l.b16 %v775
  %v1007 = vunpack.c.l.b16 %v776
  %v1008 = vunpack.c.l.b16 %v777
  %v1009 = vunpack.c.l.b16 %v778
  %v1010 = vunpack.c.l.b16 %v779
  %v1011 = vunpack.c.l.b16 %v780
  %v1012 = vunpack.c.l.b16 %v781
  %v1013 = vunpack.c.l.b16 %v782
  %v1014 = vunpack.c.l.b16 %v783
  %v1015 = vunpack.c.l.b16 %v784
  %v1016 = vunpack.c.l.b16 %v785
  %v1017 = vunpack.c.l.b16 %v786
  %v1018 = vpack.c.b16 %v971, %v970
  %v1019 = vpack.c.b16 %v973, %v972
  %v1020 = vpack.c.b16 %v975, %v974
  %v1021 = vpack.c.b16 %v977, %v976
  %v1022 = vpack.c.b16 %v979, %v978
  %v1023 = vpack.c.b16 %v981, %v980
  %v1024 = vpack.c.b16 %v983, %v982
  %v1025 = vpack.c.b16 %v985, %v984
  %v1026 = vpack.c.b16 %v987, %v986
  %v1027 = vpack.c.b16 %v989, %v988
  %v1028 = vpack.c.b16 %v991, %v990
  %v1029 = vpack.c.b16 %v993, %v992
  %v1030 = vpack.c.b16 %v995, %v994
  %v1031 = vpack.c.b16 %v997, %v996
  %v1032 = vpack.c.b16 %v999, %v998
  %v1033 = vpack.c.b16 %v1001, %v1000
  %v1034 = vpack.c.b16 %v1003, %v1002
  %v1035 = vpack.c.b16 %v1005, %v1004
  %v1036 = vpack.c.b16 %v1007, %v1006
  %v1037 = vpack.c.b16 %v1009, %v1008
  %v1038 = vpack.c.b16 %v1011, %v1010
  %v1039 = vpack.c.b16 %v1013, %v1012
  %v1040 = vpack.c.b16 %v1015, %v1014
  %v1041 = vpack.c.b16 %v1017, %v1016
  %1066 = vmatprep.subr.bf16.mxu0 0
  %1067 = vmatpush1.bf16.msra.mxu0 %v1025
  %1068 = vmatprep.subr.bf16.mxu0 0
  %1069 = vmatpush1.bf16.msra.mxu0 %v1024
  %1070 = vmatprep.subr.bf16.mxu0 0
  %1071 = vmatpush1.bf16.msra.mxu0 %v1023
  %1072 = vmatprep.subr.bf16.mxu0 0
  %1073 = vmatpush1.bf16.msra.mxu0 %v1022
  %1074 = vmatprep.subr.bf16.mxu0 0
  %1075 = vmatpush1.bf16.msra.mxu0 %v1021
  %1076 = vmatprep.subr.bf16.mxu0 0
  %1077 = vmatpush1.bf16.msra.mxu0 %v1020
  %1078 = vmatprep.subr.bf16.mxu0 0
  %1079 = vmatpush1.bf16.msra.mxu0 %v1019
  %1080 = vmatprep.subr.bf16.mxu0 0
  %1081 = vmatpush1.bf16.msra.mxu0 %v1018
  %1082 = vmatprep.subr.bf16.mxu0 0
  %1083 = vmatpush2.bf16.msra.mxu0 %v1033
  %1084 = vmatprep.subr.bf16.mxu0 0
  %1085 = vmatpush2.bf16.msra.mxu0 %v1032
  %1086 = vmatprep.subr.bf16.mxu0 0
  %1087 = vmatpush2.bf16.msra.mxu0 %v1031
  %1088 = vmatprep.subr.bf16.mxu0 0
  %1089 = vmatpush2.bf16.msra.mxu0 %v1030
  %1090 = vmatprep.subr.bf16.mxu0 0
  %1091 = vmatpush2.bf16.msra.mxu0 %v1029
  %1092 = vmatprep.subr.bf16.mxu0 0
  %1093 = vmatpush2.bf16.msra.mxu0 %v1028
  %1094 = vmatprep.subr.bf16.mxu0 0
  %1095 = vmatpush2.bf16.msra.mxu0 %v1027
  %1096 = vmatprep.subr.bf16.mxu0 0
  %1097 = vmatpush2.bf16.msra.mxu0 %v1026
  %1098 = vmatprep.mubr.bf16.mxu0 %v875
  %1099 = vmatmul.mubr.bf16.gmra.mxu0 %v874
  %v1100 = vpop.f32.mrf.mxu0
  %v1101 = vadd.f32 %v792, %v1100
  %v1102 = vpop.f32.mrf.mxu0
  %v1103 = vpop.f32.mrf.mxu0
  %v1104 = vadd.f32 %v792, %v1103
  %v1105 = vpop.f32.mrf.mxu0
  %1106 = vmatprep.mubr.bf16.mxu0 %v878
  %1107 = vmatmul.mubr.bf16.gmra.mxu0 %v877
  %v1108 = vpop.f32.mrf.mxu0
  %v1109 = vadd.f32 %v792, %v1108
  %v1110 = vpop.f32.mrf.mxu0
  %v1111 = vpop.f32.mrf.mxu0
  %v1112 = vadd.f32 %v792, %v1111
  %v1113 = vpop.f32.mrf.mxu0
  %1114 = vmatprep.mubr.bf16.mxu0 %v881
  %1115 = vmatmul.mubr.bf16.gmra.mxu0 %v880
  %v1116 = vpop.f32.mrf.mxu0
  %v1117 = vadd.f32 %v792, %v1116
  %v1118 = vpop.f32.mrf.mxu0
  %v1119 = vpop.f32.mrf.mxu0
  %v1120 = vadd.f32 %v792, %v1119
  %v1121 = vpop.f32.mrf.mxu0
  %1122 = vmatprep.mubr.bf16.mxu0 %v884
  %1123 = vmatmul.mubr.bf16.gmra.mxu0 %v883
  %v1124 = vpop.f32.mrf.mxu0
  %v1125 = vadd.f32 %v792, %v1124
  %v1126 = vpop.f32.mrf.mxu0
  %v1127 = vpop.f32.mrf.mxu0
  %v1128 = vadd.f32 %v792, %v1127
  %v1129 = vpop.f32.mrf.mxu0
  %1130 = vmatprep.mubr.bf16.mxu0 %v887
  %1131 = vmatmul.mubr.bf16.gmra.mxu0 %v886
  %v1132 = vpop.f32.mrf.mxu0
  %v1133 = vadd.f32 %v792, %v1132
  %v1134 = vpop.f32.mrf.mxu0
  %v1135 = vpop.f32.mrf.mxu0
  %v1136 = vadd.f32 %v792, %v1135
  %v1137 = vpop.f32.mrf.mxu0
  %1138 = vmatprep.mubr.bf16.mxu0 %v890
  %1139 = vmatmul.mubr.bf16.gmra.mxu0 %v889
  %v1140 = vpop.f32.mrf.mxu0
  %v1141 = vadd.f32 %v792, %v1140
  %v1142 = vpop.f32.mrf.mxu0
  %v1143 = vpop.f32.mrf.mxu0
  %v1144 = vadd.f32 %v792, %v1143
  %v1145 = vpop.f32.mrf.mxu0
  %1146 = vmatprep.mubr.bf16.mxu0 %v893
  %1147 = vmatmul.mubr.bf16.gmra.mxu0 %v892
  %v1148 = vpop.f32.mrf.mxu0
  %v1149 = vadd.f32 %v792, %v1148
  %v1150 = vpop.f32.mrf.mxu0
  %v1151 = vpop.f32.mrf.mxu0
  %v1152 = vadd.f32 %v792, %v1151
  %v1153 = vpop.f32.mrf.mxu0
  %1154 = vmatprep.mubr.bf16.mxu0 %v896
  %1155 = vmatmul.mubr.bf16.gmra.mxu0 %v895
  %v1156 = vpop.f32.mrf.mxu0
  %v1157 = vadd.f32 %v792, %v1156
  %v1158 = vpop.f32.mrf.mxu0
  %v1159 = vpop.f32.mrf.mxu0
  %v1160 = vadd.f32 %v792, %v1159
  %v1161 = vpop.f32.mrf.mxu0
  %1162 = vdwg.mxu0
  %1163 = vmatprep.subr.bf16.mxu0 0
  %1164 = vmatpush1.bf16.msra.mxu0 %v1041
  %1165 = vmatprep.subr.bf16.mxu0 0
  %1166 = vmatpush1.bf16.msra.mxu0 %v1040
  %1167 = vmatprep.subr.bf16.mxu0 0
  %1168 = vmatpush1.bf16.msra.mxu0 %v1039
  %1169 = vmatprep.subr.bf16.mxu0 0
  %1170 = vmatpush1.bf16.msra.mxu0 %v1038
  %1171 = vmatprep.subr.bf16.mxu0 0
  %1172 = vmatpush1.bf16.msra.mxu0 %v1037
  %1173 = vmatprep.subr.bf16.mxu0 0
  %1174 = vmatpush1.bf16.msra.mxu0 %v1036
  %1175 = vmatprep.subr.bf16.mxu0 0
  %1176 = vmatpush1.bf16.msra.mxu0 %v1035
  %1177 = vmatprep.subr.bf16.mxu0 0
  %1178 = vmatpush1.bf16.msra.mxu0 %v1034
  %1179 = vmatprep.subr.bf16.mxu0 0
  %1180 = vmatpush2.bf16.msra.mxu0 0
  %1181 = vmatprep.subr.bf16.mxu0 0
  %1182 = vmatpush2.bf16.msra.mxu0 0
  %1183 = vmatprep.subr.bf16.mxu0 0
  %1184 = vmatpush2.bf16.msra.mxu0 0
  %1185 = vmatprep.subr.bf16.mxu0 0
  %1186 = vmatpush2.bf16.msra.mxu0 0
  %1187 = vmatprep.subr.bf16.mxu0 0
  %1188 = vmatpush2.bf16.msra.mxu0 0
  %1189 = vmatprep.subr.bf16.mxu0 0
  %1190 = vmatpush2.bf16.msra.mxu0 0
  %1191 = vmatprep.subr.bf16.mxu0 0
  %1192 = vmatpush2.bf16.msra.mxu0 0
  %1193 = vmatprep.subr.bf16.mxu0 0
  %1194 = vmatpush2.bf16.msra.mxu0 0
  %1195 = vmatprep.mubr.bf16.mxu0 0
  %1196 = vmatmul.mubr.bf16.gmra.mxu0 %v876
  %v1197 = vpop.f32.mrf.mxu0
  %v1198 = vadd.f32 %v1101, %v1197
  %v1199 = vpop.f32.mrf.mxu0
  %v1200 = vpop.f32.mrf.mxu0
  %v1201 = vadd.f32 %v1104, %v1200
  %v1202 = vpop.f32.mrf.mxu0
  %1203 = vmatprep.mubr.bf16.mxu0 0
  %1204 = vmatmul.mubr.bf16.gmra.mxu0 %v879
  %v1205 = vpop.f32.mrf.mxu0
  %v1206 = vadd.f32 %v1109, %v1205
  %v1207 = vpop.f32.mrf.mxu0
  %v1208 = vpop.f32.mrf.mxu0
  %v1209 = vadd.f32 %v1112, %v1208
  %v1210 = vpop.f32.mrf.mxu0
  %1211 = vmatprep.mubr.bf16.mxu0 0
  %1212 = vmatmul.mubr.bf16.gmra.mxu0 %v882
  %v1213 = vpop.f32.mrf.mxu0
  %v1214 = vadd.f32 %v1117, %v1213
  %v1215 = vpop.f32.mrf.mxu0
  %v1216 = vpop.f32.mrf.mxu0
  %v1217 = vadd.f32 %v1120, %v1216
  %v1218 = vpop.f32.mrf.mxu0
  %1219 = vmatprep.mubr.bf16.mxu0 0
  %1220 = vmatmul.mubr.bf16.gmra.mxu0 %v885
  %v1221 = vpop.f32.mrf.mxu0
  %v1222 = vadd.f32 %v1125, %v1221
  %v1223 = vpop.f32.mrf.mxu0
  %v1224 = vpop.f32.mrf.mxu0
  %v1225 = vadd.f32 %v1128, %v1224
  %v1226 = vpop.f32.mrf.mxu0
  %1227 = vmatprep.mubr.bf16.mxu0 0
  %1228 = vmatmul.mubr.bf16.gmra.mxu0 %v888
  %v1229 = vpop.f32.mrf.mxu0
  %v1230 = vadd.f32 %v1133, %v1229
  %v1231 = vpop.f32.mrf.mxu0
  %v1232 = vpop.f32.mrf.mxu0
  %v1233 = vadd.f32 %v1136, %v1232
  %v1234 = vpop.f32.mrf.mxu0
  %1235 = vmatprep.mubr.bf16.mxu0 0
  %1236 = vmatmul.mubr.bf16.gmra.mxu0 %v891
  %v1237 = vpop.f32.mrf.mxu0
  %v1238 = vadd.f32 %v1141, %v1237
  %v1239 = vpop.f32.mrf.mxu0
  %v1240 = vpop.f32.mrf.mxu0
  %v1241 = vadd.f32 %v1144, %v1240
  %v1242 = vpop.f32.mrf.mxu0
  %1243 = vmatprep.mubr.bf16.mxu0 0
  %1244 = vmatmul.mubr.bf16.gmra.mxu0 %v894
  %v1245 = vpop.f32.mrf.mxu0
  %v1246 = vadd.f32 %v1149, %v1245
  %v1247 = vpop.f32.mrf.mxu0
  %v1248 = vpop.f32.mrf.mxu0
  %v1249 = vadd.f32 %v1152, %v1248
  %v1250 = vpop.f32.mrf.mxu0
  %1251 = vmatprep.mubr.bf16.mxu0 0
  %1252 = vmatmul.mubr.bf16.gmra.mxu0 %v897
  %v1253 = vpop.f32.mrf.mxu0
  %v1254 = vadd.f32 %v1157, %v1253
  %v1255 = vpop.f32.mrf.mxu0
  %v1256 = vpop.f32.mrf.mxu0
  %v1257 = vadd.f32 %v1160, %v1256
  %v1258 = vpop.f32.mrf.mxu0
  %1259 = vdwg.mxu0
  %v1260 = vmax.f32 %v1198, 0.0
  %v1261 = vmax.f32 %v1201, 0.0
  %v1262 = vmax.f32 %v1206, 0.0
  %v1263 = vmax.f32 %v1209, 0.0
  %v1264 = vmax.f32 %v1214, 0.0
  %v1265 = vmax.f32 %v1217, 0.0
  %v1266 = vmax.f32 %v1222, 0.0
  %v1267 = vmax.f32 %v1225, 0.0
  %v1268 = vmax.f32 %v1230, 0.0
  %v1269 = vmax.f32 %v1233, 0.0
  %v1270 = vmax.f32 %v1238, 0.0
  %v1271 = vmax.f32 %v1241, 0.0
  %v1272 = vmax.f32 %v1246, 0.0
  %v1273 = vmax.f32 %v1249, 0.0
  %v1274 = vmax.f32 %v1254, 0.0
  %v1275 = vmax.f32 %v1257, 0.0
  %v1276 = vpack.c.bf16 %v1261, %v1260
  %v1277 = vpack.c.bf16 %v1263, %v1262
  %v1278 = vpack.c.bf16 %v1265, %v1264
  %v1279 = vpack.c.bf16 %v1267, %v1266
  %v1280 = vpack.c.bf16 %v1269, %v1268
  %v1281 = vpack.c.bf16 %v1271, %v1270
  %v1282 = vpack.c.bf16 %v1273, %v1272
  %v1283 = vpack.c.bf16 %v1275, %v1274
  %v1284 = vld [vmem:[%s4] sm:$0xff]
  %v1285 = vld [vmem:[%s4 + $0x8] sm:$0xf]
  %v1286 = vld [vmem:[%s4 + $0xc] sm:$0xff]
  %v1287 = vld [vmem:[%s4 + $0x14] sm:$0xf]
  %v1288 = vld [vmem:[%s4 + $0x18] sm:$0xff]
  %v1289 = vld [vmem:[%s4 + $0x20] sm:$0xf]
  %v1290 = vld [vmem:[%s4 + $0x24] sm:$0xff]
  %v1291 = vld [vmem:[%s4 + $0x2c] sm:$0xf]
  %v1292 = vld [vmem:[%s4 + $0x30] sm:$0xff]
  %v1293 = vld [vmem:[%s4 + $0x38] sm:$0xf]
  %v1294 = vld [vmem:[%s4 + $0x3c] sm:$0xff]
  %v1295 = vld [vmem:[%s4 + $0x44] sm:$0xf]
  %v1296 = vld [vmem:[%s4 + $0x48] sm:$0xff]
  %v1297 = vld [vmem:[%s4 + $0x50] sm:$0xf]
  %v1298 = vld [vmem:[%s4 + $0x54] sm:$0xff]
  %v1299 = vld [vmem:[%s4 + $0x5c] sm:$0xf]
  %v1300 = vld [vmem:[%s4 + $0x60] sm:$0xff]
  %v1301 = vld [vmem:[%s4 + $0x68] sm:$0xf]
  %v1302 = vld [vmem:[%s4 + $0x6c] sm:$0xff]
  %v1303 = vld [vmem:[%s4 + $0x74] sm:$0xf]
  %v1304 = vld [vmem:[%s4 + $0x78] sm:$0xff]
  %v1305 = vld [vmem:[%s4 + $0x80] sm:$0xf]
  %v1306 = vld [vmem:[%s4 + $0x84] sm:$0xff]
  %v1307 = vld [vmem:[%s4 + $0x8c] sm:$0xf]
  %v1308 = vld [vmem:[%s4 + $0x90] sm:$0xff]
  %v1309 = vld [vmem:[%s4 + $0x98] sm:$0xf]
  %v1310 = vld [vmem:[%s4 + $0x9c] sm:$0xff]
  %v1311 = vld [vmem:[%s4 + $0xa4] sm:$0xf]
  %v1312 = vld [vmem:[%s4 + $0xa8] sm:$0xff]
  %v1313 = vld [vmem:[%s4 + $0xb0] sm:$0xf]
  %v1314 = vld [vmem:[%s4 + $0xb4] sm:$0xff]
  %v1315 = vld [vmem:[%s4 + $0xbc] sm:$0xf]
  %v1348 = vunpack.c.l.b16 %v1284
  %v1349 = vunpack.c.h.b16 %v1284
  %v1350 = vunpack.c.l.b16 %v1285
  %v1351 = vunpack.c.l.b16 %v1286
  %v1352 = vunpack.c.h.b16 %v1286
  %v1353 = vunpack.c.l.b16 %v1287
  %v1354 = vunpack.c.l.b16 %v1288
  %v1355 = vunpack.c.h.b16 %v1288
  %v1356 = vunpack.c.l.b16 %v1289
  %v1357 = vunpack.c.l.b16 %v1290
  %v1358 = vunpack.c.h.b16 %v1290
  %v1359 = vunpack.c.l.b16 %v1291
  %v1360 = vunpack.c.l.b16 %v1292
  %v1361 = vunpack.c.h.b16 %v1292
  %v1362 = vunpack.c.l.b16 %v1293
  %v1363 = vunpack.c.l.b16 %v1294
  %v1364 = vunpack.c.h.b16 %v1294
  %v1365 = vunpack.c.l.b16 %v1295
  %v1366 = vunpack.c.l.b16 %v1296
  %v1367 = vunpack.c.h.b16 %v1296
  %v1368 = vunpack.c.l.b16 %v1297
  %v1369 = vunpack.c.l.b16 %v1298
  %v1370 = vunpack.c.h.b16 %v1298
  %v1371 = vunpack.c.l.b16 %v1299
  %v1372 = vunpack.c.l.b16 %v1300
  %v1373 = vunpack.c.h.b16 %v1300
  %v1374 = vunpack.c.l.b16 %v1301
  %v1375 = vunpack.c.l.b16 %v1302
  %v1376 = vunpack.c.h.b16 %v1302
  %v1377 = vunpack.c.l.b16 %v1303
  %v1378 = vunpack.c.l.b16 %v1304
  %v1379 = vunpack.c.h.b16 %v1304
  %v1380 = vunpack.c.l.b16 %v1305
  %v1381 = vunpack.c.l.b16 %v1306
  %v1382 = vunpack.c.h.b16 %v1306
  %v1383 = vunpack.c.l.b16 %v1307
  %v1384 = vunpack.c.l.b16 %v1308
  %v1385 = vunpack.c.h.b16 %v1308
  %v1386 = vunpack.c.l.b16 %v1309
  %v1387 = vunpack.c.l.b16 %v1310
  %v1388 = vunpack.c.h.b16 %v1310
  %v1389 = vunpack.c.l.b16 %v1311
  %v1390 = vunpack.c.l.b16 %v1312
  %v1391 = vunpack.c.h.b16 %v1312
  %v1392 = vunpack.c.l.b16 %v1313
  %v1393 = vunpack.c.l.b16 %v1314
  %v1394 = vunpack.c.h.b16 %v1314
  %v1395 = vunpack.c.l.b16 %v1315
  %v1396 = vpack.c.b16 %v1351, %v1348
  %v1397 = vpack.c.b16 %v1352, %v1349
  %v1398 = vpack.c.b16 %v1353, %v1350
  %v1399 = vpack.c.b16 %v1357, %v1354
  %v1400 = vpack.c.b16 %v1358, %v1355
  %v1401 = vpack.c.b16 %v1359, %v1356
  %v1402 = vpack.c.b16 %v1363, %v1360
  %v1403 = vpack.c.b16 %v1364, %v1361
  %v1404 = vpack.c.b16 %v1365, %v1362
  %v1405 = vpack.c.b16 %v1369, %v1366
  %v1406 = vpack.c.b16 %v1370, %v1367
  %v1407 = vpack.c.b16 %v1371, %v1368
  %v1408 = vpack.c.b16 %v1375, %v1372
  %v1409 = vpack.c.b16 %v1376, %v1373
  %v1410 = vpack.c.b16 %v1377, %v1374
  %v1411 = vpack.c.b16 %v1381, %v1378
  %v1412 = vpack.c.b16 %v1382, %v1379
  %v1413 = vpack.c.b16 %v1383, %v1380
  %v1414 = vpack.c.b16 %v1387, %v1384
  %v1415 = vpack.c.b16 %v1388, %v1385
  %v1416 = vpack.c.b16 %v1389, %v1386
  %v1417 = vpack.c.b16 %v1393, %v1390
  %v1418 = vpack.c.b16 %v1394, %v1391
  %v1419 = vpack.c.b16 %v1395, %v1392
  %1444 = vmatprep.subr.bf16.mxu0 %v1418
  %1445 = vmatpush1.bf16.msra.mxu0 %v1417
  %1446 = vmatprep.subr.bf16.mxu0 %v1415
  %1447 = vmatpush1.bf16.msra.mxu0 %v1414
  %1448 = vmatprep.subr.bf16.mxu0 %v1412
  %1449 = vmatpush1.bf16.msra.mxu0 %v1411
  %1450 = vmatprep.subr.bf16.mxu0 %v1409
  %1451 = vmatpush1.bf16.msra.mxu0 %v1408
  %1452 = vmatprep.subr.bf16.mxu0 %v1406
  %1453 = vmatpush1.bf16.msra.mxu0 %v1405
  %1454 = vmatprep.subr.bf16.mxu0 %v1403
  %1455 = vmatpush1.bf16.msra.mxu0 %v1402
  %1456 = vmatprep.subr.bf16.mxu0 %v1400
  %1457 = vmatpush1.bf16.msra.mxu0 %v1399
  %1458 = vmatprep.subr.bf16.mxu0 %v1397
  %1459 = vmatpush1.bf16.msra.mxu0 %v1396
  %1460 = vmatprep.subr.bf16.mxu0 0
  %1461 = vmatpush2.bf16.msra.mxu0 0
  %1462 = vmatprep.subr.bf16.mxu0 0
  %1463 = vmatpush2.bf16.msra.mxu0 0
  %1464 = vmatprep.subr.bf16.mxu0 0
  %1465 = vmatpush2.bf16.msra.mxu0 0
  %1466 = vmatprep.subr.bf16.mxu0 0
  %1467 = vmatpush2.bf16.msra.mxu0 0
  %1468 = vmatprep.subr.bf16.mxu0 0
  %1469 = vmatpush2.bf16.msra.mxu0 0
  %1470 = vmatprep.subr.bf16.mxu0 0
  %1471 = vmatpush2.bf16.msra.mxu0 0
  %1472 = vmatprep.subr.bf16.mxu0 0
  %1473 = vmatpush2.bf16.msra.mxu0 0
  %1474 = vmatprep.subr.bf16.mxu0 0
  %1475 = vmatpush2.bf16.msra.mxu0 0
  %1476 = vmatprep.mubr.bf16.mxu0 0
  %1477 = vmatmul.mubr.bf16.gmra.mxu0 %v1276
  %v1478 = vpop.f32.mrf.mxu0
  %v1479 = vadd.f32 0.0, %v1478
  %v1480 = vpop.f32.mrf.mxu0
  %v1481 = vadd.f32 0.0, %v1480
  %v1482 = vpop.f32.mrf.mxu0
  %v1483 = vadd.f32 0.0, %v1482
  %v1484 = vpop.f32.mrf.mxu0
  %v1485 = vadd.f32 0.0, %v1484
  %1486 = vmatprep.mubr.bf16.mxu0 0
  %1487 = vmatmul.mubr.bf16.gmra.mxu0 %v1277
  %v1488 = vpop.f32.mrf.mxu0
  %v1489 = vadd.f32 0.0, %v1488
  %v1490 = vpop.f32.mrf.mxu0
  %v1491 = vadd.f32 0.0, %v1490
  %v1492 = vpop.f32.mrf.mxu0
  %v1493 = vadd.f32 0.0, %v1492
  %v1494 = vpop.f32.mrf.mxu0
  %v1495 = vadd.f32 0.0, %v1494
  %1496 = vmatprep.mubr.bf16.mxu0 0
  %1497 = vmatmul.mubr.bf16.gmra.mxu0 %v1278
  %v1498 = vpop.f32.mrf.mxu0
  %v1499 = vadd.f32 0.0, %v1498
  %v1500 = vpop.f32.mrf.mxu0
  %v1501 = vadd.f32 0.0, %v1500
  %v1502 = vpop.f32.mrf.mxu0
  %v1503 = vadd.f32 0.0, %v1502
  %v1504 = vpop.f32.mrf.mxu0
  %v1505 = vadd.f32 0.0, %v1504
  %1506 = vmatprep.mubr.bf16.mxu0 0
  %1507 = vmatmul.mubr.bf16.gmra.mxu0 %v1279
  %v1508 = vpop.f32.mrf.mxu0
  %v1509 = vadd.f32 0.0, %v1508
  %v1510 = vpop.f32.mrf.mxu0
  %v1511 = vadd.f32 0.0, %v1510
  %v1512 = vpop.f32.mrf.mxu0
  %v1513 = vadd.f32 0.0, %v1512
  %v1514 = vpop.f32.mrf.mxu0
  %v1515 = vadd.f32 0.0, %v1514
  %1516 = vmatprep.mubr.bf16.mxu0 0
  %1517 = vmatmul.mubr.bf16.gmra.mxu0 %v1280
  %v1518 = vpop.f32.mrf.mxu0
  %v1519 = vadd.f32 0.0, %v1518
  %v1520 = vpop.f32.mrf.mxu0
  %v1521 = vadd.f32 0.0, %v1520
  %v1522 = vpop.f32.mrf.mxu0
  %v1523 = vadd.f32 0.0, %v1522
  %v1524 = vpop.f32.mrf.mxu0
  %v1525 = vadd.f32 0.0, %v1524
  %1526 = vmatprep.mubr.bf16.mxu0 0
  %1527 = vmatmul.mubr.bf16.gmra.mxu0 %v1281
  %v1528 = vpop.f32.mrf.mxu0
  %v1529 = vadd.f32 0.0, %v1528
  %v1530 = vpop.f32.mrf.mxu0
  %v1531 = vadd.f32 0.0, %v1530
  %v1532 = vpop.f32.mrf.mxu0
  %v1533 = vadd.f32 0.0, %v1532
  %v1534 = vpop.f32.mrf.mxu0
  %v1535 = vadd.f32 0.0, %v1534
  %1536 = vmatprep.mubr.bf16.mxu0 0
  %1537 = vmatmul.mubr.bf16.gmra.mxu0 %v1282
  %v1538 = vpop.f32.mrf.mxu0
  %v1539 = vadd.f32 0.0, %v1538
  %v1540 = vpop.f32.mrf.mxu0
  %v1541 = vadd.f32 0.0, %v1540
  %v1542 = vpop.f32.mrf.mxu0
  %v1543 = vadd.f32 0.0, %v1542
  %v1544 = vpop.f32.mrf.mxu0
  %v1545 = vadd.f32 0.0, %v1544
  %1546 = vmatprep.mubr.bf16.mxu0 0
  %1547 = vmatmul.mubr.bf16.gmra.mxu0 %v1283
  %v1548 = vpop.f32.mrf.mxu0
  %v1549 = vadd.f32 0.0, %v1548
  %v1550 = vpop.f32.mrf.mxu0
  %v1551 = vadd.f32 0.0, %v1550
  %v1552 = vpop.f32.mrf.mxu0
  %v1553 = vadd.f32 0.0, %v1552
  %v1554 = vpop.f32.mrf.mxu0
  %v1555 = vadd.f32 0.0, %v1554
  %1556 = vdwg.mxu0
  %1557 = vmatprep.subr.bf16.mxu0 0
  %1558 = vmatpush1.bf16.msra.mxu0 %v1419
  %1559 = vmatprep.subr.bf16.mxu0 0
  %1560 = vmatpush1.bf16.msra.mxu0 %v1416
  %1561 = vmatprep.subr.bf16.mxu0 0
  %1562 = vmatpush1.bf16.msra.mxu0 %v1413
  %1563 = vmatprep.subr.bf16.mxu0 0
  %1564 = vmatpush1.bf16.msra.mxu0 %v1410
  %1565 = vmatprep.subr.bf16.mxu0 0
  %1566 = vmatpush1.bf16.msra.mxu0 %v1407
  %1567 = vmatprep.subr.bf16.mxu0 0
  %1568 = vmatpush1.bf16.msra.mxu0 %v1404
  %1569 = vmatprep.subr.bf16.mxu0 0
  %1570 = vmatpush1.bf16.msra.mxu0 %v1401
  %1571 = vmatprep.subr.bf16.mxu0 0
  %1572 = vmatpush1.bf16.msra.mxu0 %v1398
  %1573 = vmatprep.subr.bf16.mxu0 0
  %1574 = vmatpush2.bf16.msra.mxu0 0
  %1575 = vmatprep.subr.bf16.mxu0 0
  %1576 = vmatpush2.bf16.msra.mxu0 0
  %1577 = vmatprep.subr.bf16.mxu0 0
  %1578 = vmatpush2.bf16.msra.mxu0 0
  %1579 = vmatprep.subr.bf16.mxu0 0
  %1580 = vmatpush2.bf16.msra.mxu0 0
  %1581 = vmatprep.subr.bf16.mxu0 0
  %1582 = vmatpush2.bf16.msra.mxu0 0
  %1583 = vmatprep.subr.bf16.mxu0 0
  %1584 = vmatpush2.bf16.msra.mxu0 0
  %1585 = vmatprep.subr.bf16.mxu0 0
  %1586 = vmatpush2.bf16.msra.mxu0 0
  %1587 = vmatprep.subr.bf16.mxu0 0
  %1588 = vmatpush2.bf16.msra.mxu0 0
  %1589 = vmatprep.mubr.bf16.mxu0 0
  %1590 = vmatmul.mubr.bf16.gmra.mxu0 %v1276
  %v1591 = vpop.f32.mrf.mxu0
  %v1592 = vadd.f32 0.0, %v1591
  %v1593 = vpop.f32.mrf.mxu0
  %v1594 = vpop.f32.mrf.mxu0
  %v1595 = vadd.f32 0.0, %v1594
  %v1596 = vpop.f32.mrf.mxu0
  %1597 = vmatprep.mubr.bf16.mxu0 0
  %1598 = vmatmul.mubr.bf16.gmra.mxu0 %v1277
  %v1599 = vpop.f32.mrf.mxu0
  %v1600 = vadd.f32 0.0, %v1599
  %v1601 = vpop.f32.mrf.mxu0
  %v1602 = vpop.f32.mrf.mxu0
  %v1603 = vadd.f32 0.0, %v1602
  %v1604 = vpop.f32.mrf.mxu0
  %1605 = vmatprep.mubr.bf16.mxu0 0
  %1606 = vmatmul.mubr.bf16.gmra.mxu0 %v1278
  %v1607 = vpop.f32.mrf.mxu0
  %v1608 = vadd.f32 0.0, %v1607
  %v1609 = vpop.f32.mrf.mxu0
  %v1610 = vpop.f32.mrf.mxu0
  %v1611 = vadd.f32 0.0, %v1610
  %v1612 = vpop.f32.mrf.mxu0
  %1613 = vmatprep.mubr.bf16.mxu0 0
  %1614 = vmatmul.mubr.bf16.gmra.mxu0 %v1279
  %v1615 = vpop.f32.mrf.mxu0
  %v1616 = vadd.f32 0.0, %v1615
  %v1617 = vpop.f32.mrf.mxu0
  %v1618 = vpop.f32.mrf.mxu0
  %v1619 = vadd.f32 0.0, %v1618
  %v1620 = vpop.f32.mrf.mxu0
  %1621 = vmatprep.mubr.bf16.mxu0 0
  %1622 = vmatmul.mubr.bf16.gmra.mxu0 %v1280
  %v1623 = vpop.f32.mrf.mxu0
  %v1624 = vadd.f32 0.0, %v1623
  %v1625 = vpop.f32.mrf.mxu0
  %v1626 = vpop.f32.mrf.mxu0
  %v1627 = vadd.f32 0.0, %v1626
  %v1628 = vpop.f32.mrf.mxu0
  %1629 = vmatprep.mubr.bf16.mxu0 0
  %1630 = vmatmul.mubr.bf16.gmra.mxu0 %v1281
  %v1631 = vpop.f32.mrf.mxu0
  %v1632 = vadd.f32 0.0, %v1631
  %v1633 = vpop.f32.mrf.mxu0
  %v1634 = vpop.f32.mrf.mxu0
  %v1635 = vadd.f32 0.0, %v1634
  %v1636 = vpop.f32.mrf.mxu0
  %1637 = vmatprep.mubr.bf16.mxu0 0
  %1638 = vmatmul.mubr.bf16.gmra.mxu0 %v1282
  %v1639 = vpop.f32.mrf.mxu0
  %v1640 = vadd.f32 0.0, %v1639
  %v1641 = vpop.f32.mrf.mxu0
  %v1642 = vpop.f32.mrf.mxu0
  %v1643 = vadd.f32 0.0, %v1642
  %v1644 = vpop.f32.mrf.mxu0
  %1645 = vmatprep.mubr.bf16.mxu0 0
  %1646 = vmatmul.mubr.bf16.gmra.mxu0 %v1283
  %v1647 = vpop.f32.mrf.mxu0
  %v1648 = vadd.f32 0.0, %v1647
  %v1649 = vpop.f32.mrf.mxu0
  %v1650 = vpop.f32.mrf.mxu0
  %v1651 = vadd.f32 0.0, %v1650
  %v1652 = vpop.f32.mrf.mxu0
  %1653 = vdwg.mxu0
  %v1654 = vpack.c.bf16 %v1483, %v1479
  %v1655 = vpack.c.bf16 %v1485, %v1481
  %v1656 = vpack.c.bf16 %v1595, %v1592
  %v1657 = vpack.c.bf16 %v1493, %v1489
  %v1658 = vpack.c.bf16 %v1495, %v1491
  %v1659 = vpack.c.bf16 %v1603, %v1600
  %v1660 = vpack.c.bf16 %v1503, %v1499
  %v1661 = vpack.c.bf16 %v1505, %v1501
  %v1662 = vpack.c.bf16 %v1611, %v1608
  %v1663 = vpack.c.bf16 %v1513, %v1509
  %v1664 = vpack.c.bf16 %v1515, %v1511
  %v1665 = vpack.c.bf16 %v1619, %v1616
  %v1666 = vpack.c.bf16 %v1523, %v1519
  %v1667 = vpack.c.bf16 %v1525, %v1521
  %v1668 = vpack.c.bf16 %v1627, %v1624
  %v1669 = vpack.c.bf16 %v1533, %v1529
  %v1670 = vpack.c.bf16 %v1535, %v1531
  %v1671 = vpack.c.bf16 %v1635, %v1632
  %v1672 = vpack.c.bf16 %v1543, %v1539
  %v1673 = vpack.c.bf16 %v1545, %v1541
  %v1674 = vpack.c.bf16 %v1643, %v1640
  %v1675 = vpack.c.bf16 %v1553, %v1549
  %v1676 = vpack.c.bf16 %v1555, %v1551
  %v1677 = vpack.c.bf16 %v1651, %v1648
  %v1686 = vunpack.c.l.b16 %v1654
  %v1687 = vunpack.c.h.b16 %v1654
  %v1688 = vunpack.c.l.b16 %v1657
  %v1689 = vunpack.c.h.b16 %v1657
  %v1690 = vunpack.c.l.b16 %v1660
  %v1691 = vunpack.c.h.b16 %v1660
  %v1692 = vunpack.c.l.b16 %v1663
  %v1693 = vunpack.c.h.b16 %v1663
  %v1694 = vunpack.c.l.b16 %v1666
  %v1695 = vunpack.c.h.b16 %v1666
  %v1696 = vunpack.c.l.b16 %v1669
  %v1697 = vunpack.c.h.b16 %v1669
  %v1698 = vunpack.c.l.b16 %v1672
  %v1699 = vunpack.c.h.b16 %v1672
  %v1700 = vunpack.c.l.b16 %v1675
  %v1701 = vunpack.c.h.b16 %v1675
  %v1702 = vpack.c.b16 %v1686, %v1686
  %v1703 = vpack.c.b16 %v1687, %v1687
  %v1704 = vpack.c.b16 %v1688, %v1688
  %v1705 = vpack.c.b16 %v1689, %v1689
  %v1706 = vpack.c.b16 %v1690, %v1690
  %v1707 = vpack.c.b16 %v1691, %v1691
  %v1708 = vpack.c.b16 %v1692, %v1692
  %v1709 = vpack.c.b16 %v1693, %v1693
  %v1710 = vpack.c.b16 %v1694, %v1694
  %v1711 = vpack.c.b16 %v1695, %v1695
  %v1712 = vpack.c.b16 %v1696, %v1696
  %v1713 = vpack.c.b16 %v1697, %v1697
  %v1714 = vpack.c.b16 %v1698, %v1698
  %v1715 = vpack.c.b16 %v1699, %v1699
  %v1716 = vpack.c.b16 %v1700, %v1700
  %v1717 = vpack.c.b16 %v1701, %v1701
  %1734 = vst [vmem:[#allocation2] sm:$0xf] %v1702
  %1735 = vst [vmem:[#allocation2 + $0x4] sm:$0xf] %v1703
  %1736 = vst [vmem:[#allocation2 + $0x8] sm:$0xf] %v1704
  %1737 = vst [vmem:[#allocation2 + $0xc] sm:$0xf] %v1705
  %1738 = vst [vmem:[#allocation2 + $0x10] sm:$0xf] %v1706
  %1739 = vst [vmem:[#allocation2 + $0x14] sm:$0xf] %v1707
  %1740 = vst [vmem:[#allocation2 + $0x18] sm:$0xf] %v1708
  %1741 = vst [vmem:[#allocation2 + $0x1c] sm:$0xf] %v1709
  %1742 = vst [vmem:[#allocation2 + $0x20] sm:$0xf] %v1710
  %1743 = vst [vmem:[#allocation2 + $0x24] sm:$0xf] %v1711
  %1744 = vst [vmem:[#allocation2 + $0x28] sm:$0xf] %v1712
  %1745 = vst [vmem:[#allocation2 + $0x2c] sm:$0xf] %v1713
  %1746 = vst [vmem:[#allocation2 + $0x30] sm:$0xf] %v1714
  %1747 = vst [vmem:[#allocation2 + $0x34] sm:$0xf] %v1715
  %1748 = vst [vmem:[#allocation2 + $0x38] sm:$0xf] %v1716
  %1749 = vst [vmem:[#allocation2 + $0x3c] sm:$0xf] %v1717
  %v1758 = vunpack.c.l.b16 %v1655
  %v1759 = vunpack.c.h.b16 %v1655
  %v1760 = vunpack.c.l.b16 %v1658
  %v1761 = vunpack.c.h.b16 %v1658
  %v1762 = vunpack.c.l.b16 %v1661
  %v1763 = vunpack.c.h.b16 %v1661
  %v1764 = vunpack.c.l.b16 %v1664
  %v1765 = vunpack.c.h.b16 %v1664
  %v1766 = vunpack.c.l.b16 %v1667
  %v1767 = vunpack.c.h.b16 %v1667
  %v1768 = vunpack.c.l.b16 %v1670
  %v1769 = vunpack.c.h.b16 %v1670
  %v1770 = vunpack.c.l.b16 %v1673
  %v1771 = vunpack.c.h.b16 %v1673
  %v1772 = vunpack.c.l.b16 %v1676
  %v1773 = vunpack.c.h.b16 %v1676
  %v1774 = vpack.c.b16 %v1758, %v1758
  %v1775 = vpack.c.b16 %v1759, %v1759
  %v1776 = vpack.c.b16 %v1760, %v1760
  %v1777 = vpack.c.b16 %v1761, %v1761
  %v1778 = vpack.c.b16 %v1762, %v1762
  %v1779 = vpack.c.b16 %v1763, %v1763
  %v1780 = vpack.c.b16 %v1764, %v1764
  %v1781 = vpack.c.b16 %v1765, %v1765
  %v1782 = vpack.c.b16 %v1766, %v1766
  %v1783 = vpack.c.b16 %v1767, %v1767
  %v1784 = vpack.c.b16 %v1768, %v1768
  %v1785 = vpack.c.b16 %v1769, %v1769
  %v1786 = vpack.c.b16 %v1770, %v1770
  %v1787 = vpack.c.b16 %v1771, %v1771
  %v1788 = vpack.c.b16 %v1772, %v1772
  %v1789 = vpack.c.b16 %v1773, %v1773
  %1806 = vst [vmem:[#allocation2 + $0x40] sm:$0xf] %v1774
  %1807 = vst [vmem:[#allocation2 + $0x44] sm:$0xf] %v1775
  %1808 = vst [vmem:[#allocation2 + $0x48] sm:$0xf] %v1776
  %1809 = vst [vmem:[#allocation2 + $0x4c] sm:$0xf] %v1777
  %1810 = vst [vmem:[#allocation2 + $0x50] sm:$0xf] %v1778
  %1811 = vst [vmem:[#allocation2 + $0x54] sm:$0xf] %v1779
  %1812 = vst [vmem:[#allocation2 + $0x58] sm:$0xf] %v1780
  %1813 = vst [vmem:[#allocation2 + $0x5c] sm:$0xf] %v1781
  %1814 = vst [vmem:[#allocation2 + $0x60] sm:$0xf] %v1782
  %1815 = vst [vmem:[#allocation2 + $0x64] sm:$0xf] %v1783
  %1816 = vst [vmem:[#allocation2 + $0x68] sm:$0xf] %v1784
  %1817 = vst [vmem:[#allocation2 + $0x6c] sm:$0xf] %v1785
  %1818 = vst [vmem:[#allocation2 + $0x70] sm:$0xf] %v1786
  %1819 = vst [vmem:[#allocation2 + $0x74] sm:$0xf] %v1787
  %1820 = vst [vmem:[#allocation2 + $0x78] sm:$0xf] %v1788
  %1821 = vst [vmem:[#allocation2 + $0x7c] sm:$0xf] %v1789
  %v1830 = vunpack.c.l.b16 %v1656
  %v1831 = vunpack.c.h.b16 %v1656
  %v1832 = vunpack.c.l.b16 %v1659
  %v1833 = vunpack.c.h.b16 %v1659
  %v1834 = vunpack.c.l.b16 %v1662
  %v1835 = vunpack.c.h.b16 %v1662
  %v1836 = vunpack.c.l.b16 %v1665
  %v1837 = vunpack.c.h.b16 %v1665
  %v1838 = vunpack.c.l.b16 %v1668
  %v1839 = vunpack.c.h.b16 %v1668
  %v1840 = vunpack.c.l.b16 %v1671
  %v1841 = vunpack.c.h.b16 %v1671
  %v1842 = vunpack.c.l.b16 %v1674
  %v1843 = vunpack.c.h.b16 %v1674
  %v1844 = vunpack.c.l.b16 %v1677
  %v1845 = vunpack.c.h.b16 %v1677
  %v1846 = vpack.c.b16 %v1830, %v1830
  %v1847 = vpack.c.b16 %v1831, %v1831
  %v1848 = vpack.c.b16 %v1832, %v1832
  %v1849 = vpack.c.b16 %v1833, %v1833
  %v1850 = vpack.c.b16 %v1834, %v1834
  %v1851 = vpack.c.b16 %v1835, %v1835
  %v1852 = vpack.c.b16 %v1836, %v1836
  %v1853 = vpack.c.b16 %v1837, %v1837
  %v1854 = vpack.c.b16 %v1838, %v1838
  %v1855 = vpack.c.b16 %v1839, %v1839
  %v1856 = vpack.c.b16 %v1840, %v1840
  %v1857 = vpack.c.b16 %v1841, %v1841
  %v1858 = vpack.c.b16 %v1842, %v1842
  %v1859 = vpack.c.b16 %v1843, %v1843
  %v1860 = vpack.c.b16 %v1844, %v1844
  %v1861 = vpack.c.b16 %v1845, %v1845
  %1878 = vst [vmem:[#allocation2 + $0x80] sm:$0xf] %v1846
  %1879 = vst [vmem:[#allocation2 + $0x84] sm:$0xf] %v1847
  %1880 = vst [vmem:[#allocation2 + $0x88] sm:$0xf] %v1848
  %1881 = vst [vmem:[#allocation2 + $0x8c] sm:$0xf] %v1849
  %1882 = vst [vmem:[#allocation2 + $0x90] sm:$0xf] %v1850
  %1883 = vst [vmem:[#allocation2 + $0x94] sm:$0xf] %v1851
  %1884 = vst [vmem:[#allocation2 + $0x98] sm:$0xf] %v1852
  %1885 = vst [vmem:[#allocation2 + $0x9c] sm:$0xf] %v1853
  %1886 = vst [vmem:[#allocation2 + $0xa0] sm:$0xf] %v1854
  %1887 = vst [vmem:[#allocation2 + $0xa4] sm:$0xf] %v1855
  %1888 = vst [vmem:[#allocation2 + $0xa8] sm:$0xf] %v1856
  %1889 = vst [vmem:[#allocation2 + $0xac] sm:$0xf] %v1857
  %1890 = vst [vmem:[#allocation2 + $0xb0] sm:$0xf] %v1858
  %1891 = vst [vmem:[#allocation2 + $0xb4] sm:$0xf] %v1859
  %1892 = vst [vmem:[#allocation2 + $0xb8] sm:$0xf] %v1860
  %1893 = vst [vmem:[#allocation2 + $0xbc] sm:$0xf] %v1861
  %v1894 = vld [vmem:[%s0] sm:$0xff]
  %v1895 = vld [vmem:[%s0 + $0x8] sm:$0xf]
  %v1896 = vld [vmem:[%s0 + $0xc] sm:$0xff]
  %v1897 = vld [vmem:[%s0 + $0x14] sm:$0xf]
  %v1898 = vld [vmem:[%s0 + $0x18] sm:$0xff]
  %v1899 = vld [vmem:[%s0 + $0x20] sm:$0xf]
  %v1900 = vld [vmem:[%s0 + $0x24] sm:$0xff]
  %v1901 = vld [vmem:[%s0 + $0x2c] sm:$0xf]
  %v1902 = vld [vmem:[%s0 + $0x30] sm:$0xff]
  %v1903 = vld [vmem:[%s0 + $0x38] sm:$0xf]
  %v1904 = vld [vmem:[%s0 + $0x3c] sm:$0xff]
  %v1905 = vld [vmem:[%s0 + $0x44] sm:$0xf]
  %v1906 = vld [vmem:[%s0 + $0x48] sm:$0xff]
  %v1907 = vld [vmem:[%s0 + $0x50] sm:$0xf]
  %v1908 = vld [vmem:[%s0 + $0x54] sm:$0xff]
  %v1909 = vld [vmem:[%s0 + $0x5c] sm:$0xf]
  %v1910 = vld [vmem:[%s0 + $0x60] sm:$0xff]
  %v1911 = vld [vmem:[%s0 + $0x68] sm:$0xf]
  %v1912 = vld [vmem:[%s0 + $0x6c] sm:$0xff]
  %v1913 = vld [vmem:[%s0 + $0x74] sm:$0xf]
  %v1914 = vld [vmem:[%s0 + $0x78] sm:$0xff]
  %v1915 = vld [vmem:[%s0 + $0x80] sm:$0xf]
  %v1916 = vld [vmem:[%s0 + $0x84] sm:$0xff]
  %v1917 = vld [vmem:[%s0 + $0x8c] sm:$0xf]
  %v1918 = vld [vmem:[%s0 + $0x90] sm:$0xff]
  %v1919 = vld [vmem:[%s0 + $0x98] sm:$0xf]
  %v1920 = vld [vmem:[%s0 + $0x9c] sm:$0xff]
  %v1921 = vld [vmem:[%s0 + $0xa4] sm:$0xf]
  %v1922 = vld [vmem:[%s0 + $0xa8] sm:$0xff]
  %v1923 = vld [vmem:[%s0 + $0xb0] sm:$0xf]
  %v1924 = vld [vmem:[%s0 + $0xb4] sm:$0xff]
  %v1925 = vld [vmem:[%s0 + $0xbc] sm:$0xf]
  %v1926 = vld [vmem:[#allocation2] sm:$0xf]
  %v1927 = vld [vmem:[#allocation2 + $0x4] sm:$0xf]
  %v1928 = vld [vmem:[#allocation2 + $0x8] sm:$0xf]
  %v1929 = vld [vmem:[#allocation2 + $0xc] sm:$0xf]
  %v1930 = vld [vmem:[#allocation2 + $0x10] sm:$0xf]
  %v1931 = vld [vmem:[#allocation2 + $0x14] sm:$0xf]
  %v1932 = vld [vmem:[#allocation2 + $0x18] sm:$0xf]
  %v1933 = vld [vmem:[#allocation2 + $0x1c] sm:$0xf]
  %v1934 = vld [vmem:[#allocation2 + $0x20] sm:$0xf]
  %v1935 = vld [vmem:[#allocation2 + $0x24] sm:$0xf]
  %v1936 = vld [vmem:[#allocation2 + $0x28] sm:$0xf]
  %v1937 = vld [vmem:[#allocation2 + $0x2c] sm:$0xf]
  %v1938 = vld [vmem:[#allocation2 + $0x30] sm:$0xf]
  %v1939 = vld [vmem:[#allocation2 + $0x34] sm:$0xf]
  %v1940 = vld [vmem:[#allocation2 + $0x38] sm:$0xf]
  %v1941 = vld [vmem:[#allocation2 + $0x3c] sm:$0xf]
  %v1942 = vld [vmem:[#allocation2 + $0x40] sm:$0xf]
  %v1943 = vld [vmem:[#allocation2 + $0x44] sm:$0xf]
  %v1944 = vld [vmem:[#allocation2 + $0x48] sm:$0xf]
  %v1945 = vld [vmem:[#allocation2 + $0x4c] sm:$0xf]
  %v1946 = vld [vmem:[#allocation2 + $0x50] sm:$0xf]
  %v1947 = vld [vmem:[#allocation2 + $0x54] sm:$0xf]
  %v1948 = vld [vmem:[#allocation2 + $0x58] sm:$0xf]
  %v1949 = vld [vmem:[#allocation2 + $0x5c] sm:$0xf]
  %v1950 = vld [vmem:[#allocation2 + $0x60] sm:$0xf]
  %v1951 = vld [vmem:[#allocation2 + $0x64] sm:$0xf]
  %v1952 = vld [vmem:[#allocation2 + $0x68] sm:$0xf]
  %v1953 = vld [vmem:[#allocation2 + $0x6c] sm:$0xf]
  %v1954 = vld [vmem:[#allocation2 + $0x70] sm:$0xf]
  %v1955 = vld [vmem:[#allocation2 + $0x74] sm:$0xf]
  %v1956 = vld [vmem:[#allocation2 + $0x78] sm:$0xf]
  %v1957 = vld [vmem:[#allocation2 + $0x7c] sm:$0xf]
  %v1958 = vld [vmem:[#allocation2 + $0x80] sm:$0xf]
  %v1959 = vld [vmem:[#allocation2 + $0x84] sm:$0xf]
  %v1960 = vld [vmem:[#allocation2 + $0x88] sm:$0xf]
  %v1961 = vld [vmem:[#allocation2 + $0x8c] sm:$0xf]
  %v1962 = vld [vmem:[#allocation2 + $0x90] sm:$0xf]
  %v1963 = vld [vmem:[#allocation2 + $0x94] sm:$0xf]
  %v1964 = vld [vmem:[#allocation2 + $0x98] sm:$0xf]
  %v1965 = vld [vmem:[#allocation2 + $0x9c] sm:$0xf]
  %v1966 = vld [vmem:[#allocation2 + $0xa0] sm:$0xf]
  %v1967 = vld [vmem:[#allocation2 + $0xa4] sm:$0xf]
  %v1968 = vld [vmem:[#allocation2 + $0xa8] sm:$0xf]
  %v1969 = vld [vmem:[#allocation2 + $0xac] sm:$0xf]
  %v1970 = vld [vmem:[#allocation2 + $0xb0] sm:$0xf]
  %v1971 = vld [vmem:[#allocation2 + $0xb4] sm:$0xf]
  %v1972 = vld [vmem:[#allocation2 + $0xb8] sm:$0xf]
  %v1973 = vld [vmem:[#allocation2 + $0xbc] sm:$0xf]
  %v1974 = vld [vmem:[%s5] sm:$0x1]
  %v1976 = vlaneseq
  %v1977 = vshrl.u32 %v1976, 7
  %v1978 = vsub.s32 0, %v1977
  %v1979 = vrot.slane %v1974, %v1978
  %v2013 = vunpack.c.l.b16 %v1894
  %v2014 = vunpack.c.h.b16 %v1894
  %v2015 = vunpack.c.l.b16 %v1895
  %v2016 = vunpack.c.l.b16 %v1896
  %v2017 = vunpack.c.h.b16 %v1896
  %v2018 = vunpack.c.l.b16 %v1897
  %v2019 = vunpack.c.l.b16 %v1898
  %v2020 = vunpack.c.h.b16 %v1898
  %v2021 = vunpack.c.l.b16 %v1899
  %v2022 = vunpack.c.l.b16 %v1900
  %v2023 = vunpack.c.h.b16 %v1900
  %v2024 = vunpack.c.l.b16 %v1901
  %v2025 = vunpack.c.l.b16 %v1902
  %v2026 = vunpack.c.h.b16 %v1902
  %v2027 = vunpack.c.l.b16 %v1903
  %v2028 = vunpack.c.l.b16 %v1904
  %v2029 = vunpack.c.h.b16 %v1904
  %v2030 = vunpack.c.l.b16 %v1905
  %v2031 = vunpack.c.l.b16 %v1906
  %v2032 = vunpack.c.h.b16 %v1906
  %v2033 = vunpack.c.l.b16 %v1907
  %v2034 = vunpack.c.l.b16 %v1908
  %v2035 = vunpack.c.h.b16 %v1908
  %v2036 = vunpack.c.l.b16 %v1909
  %v2037 = vunpack.c.l.b16 %v1910
  %v2038 = vunpack.c.h.b16 %v1910
  %v2039 = vunpack.c.l.b16 %v1911
  %v2040 = vunpack.c.l.b16 %v1912
  %v2041 = vunpack.c.h.b16 %v1912
  %v2042 = vunpack.c.l.b16 %v1913
  %v2043 = vunpack.c.l.b16 %v1914
  %v2044 = vunpack.c.h.b16 %v1914
  %v2045 = vunpack.c.l.b16 %v1915
  %v2046 = vunpack.c.l.b16 %v1916
  %v2047 = vunpack.c.h.b16 %v1916
  %v2048 = vunpack.c.l.b16 %v1917
  %v2049 = vunpack.c.l.b16 %v1918
  %v2050 = vunpack.c.h.b16 %v1918
  %v2051 = vunpack.c.l.b16 %v1919
  %v2052 = vunpack.c.l.b16 %v1920
  %v2053 = vunpack.c.h.b16 %v1920
  %v2054 = vunpack.c.l.b16 %v1921
  %v2055 = vunpack.c.l.b16 %v1922
  %v2056 = vunpack.c.h.b16 %v1922
  %v2057 = vunpack.c.l.b16 %v1923
  %v2058 = vunpack.c.l.b16 %v1924
  %v2059 = vunpack.c.h.b16 %v1924
  %v2060 = vunpack.c.l.b16 %v1925
  %v2061 = vpack.c.b16 %v2016, %v2013
  %v2062 = vpack.c.b16 %v2017, %v2014
  %v2063 = vpack.c.b16 %v2018, %v2015
  %v2064 = vpack.c.b16 %v2022, %v2019
  %v2065 = vpack.c.b16 %v2023, %v2020
  %v2066 = vpack.c.b16 %v2024, %v2021
  %v2067 = vpack.c.b16 %v2028, %v2025
  %v2068 = vpack.c.b16 %v2029, %v2026
  %v2069 = vpack.c.b16 %v2030, %v2027
  %v2070 = vpack.c.b16 %v2034, %v2031
  %v2071 = vpack.c.b16 %v2035, %v2032
  %v2072 = vpack.c.b16 %v2036, %v2033
  %v2073 = vpack.c.b16 %v2040, %v2037
  %v2074 = vpack.c.b16 %v2041, %v2038
  %v2075 = vpack.c.b16 %v2042, %v2039
  %v2076 = vpack.c.b16 %v2046, %v2043
  %v2077 = vpack.c.b16 %v2047, %v2044
  %v2078 = vpack.c.b16 %v2048, %v2045
  %v2079 = vpack.c.b16 %v2052, %v2049
  %v2080 = vpack.c.b16 %v2053, %v2050
  %v2081 = vpack.c.b16 %v2054, %v2051
  %v2082 = vpack.c.b16 %v2058, %v2055
  %v2083 = vpack.c.b16 %v2059, %v2056
  %v2084 = vpack.c.b16 %v2060, %v2057
  %v2157 = vunpack.c.l.b16 %v1926
  %v2158 = vunpack.c.l.b16 %v1927
  %v2159 = vunpack.c.l.b16 %v1928
  %v2160 = vunpack.c.l.b16 %v1929
  %v2161 = vunpack.c.l.b16 %v1930
  %v2162 = vunpack.c.l.b16 %v1931
  %v2163 = vunpack.c.l.b16 %v1932
  %v2164 = vunpack.c.l.b16 %v1933
  %v2165 = vunpack.c.l.b16 %v1934
  %v2166 = vunpack.c.l.b16 %v1935
  %v2167 = vunpack.c.l.b16 %v1936
  %v2168 = vunpack.c.l.b16 %v1937
  %v2169 = vunpack.c.l.b16 %v1938
  %v2170 = vunpack.c.l.b16 %v1939
  %v2171 = vunpack.c.l.b16 %v1940
  %v2172 = vunpack.c.l.b16 %v1941
  %v2173 = vunpack.c.l.b16 %v1942
  %v2174 = vunpack.c.l.b16 %v1943
  %v2175 = vunpack.c.l.b16 %v1944
  %v2176 = vunpack.c.l.b16 %v1945
  %v2177 = vunpack.c.l.b16 %v1946
  %v2178 = vunpack.c.l.b16 %v1947
  %v2179 = vunpack.c.l.b16 %v1948
  %v2180 = vunpack.c.l.b16 %v1949
  %v2181 = vunpack.c.l.b16 %v1950
  %v2182 = vunpack.c.l.b16 %v1951
  %v2183 = vunpack.c.l.b16 %v1952
  %v2184 = vunpack.c.l.b16 %v1953
  %v2185 = vunpack.c.l.b16 %v1954
  %v2186 = vunpack.c.l.b16 %v1955
  %v2187 = vunpack.c.l.b16 %v1956
  %v2188 = vunpack.c.l.b16 %v1957
  %v2189 = vunpack.c.l.b16 %v1958
  %v2190 = vunpack.c.l.b16 %v1959
  %v2191 = vunpack.c.l.b16 %v1960
  %v2192 = vunpack.c.l.b16 %v1961
  %v2193 = vunpack.c.l.b16 %v1962
  %v2194 = vunpack.c.l.b16 %v1963
  %v2195 = vunpack.c.l.b16 %v1964
  %v2196 = vunpack.c.l.b16 %v1965
  %v2197 = vunpack.c.l.b16 %v1966
  %v2198 = vunpack.c.l.b16 %v1967
  %v2199 = vunpack.c.l.b16 %v1968
  %v2200 = vunpack.c.l.b16 %v1969
  %v2201 = vunpack.c.l.b16 %v1970
  %v2202 = vunpack.c.l.b16 %v1971
  %v2203 = vunpack.c.l.b16 %v1972
  %v2204 = vunpack.c.l.b16 %v1973
  %v2205 = vpack.c.b16 %v2158, %v2157
  %v2206 = vpack.c.b16 %v2160, %v2159
  %v2207 = vpack.c.b16 %v2162, %v2161
  %v2208 = vpack.c.b16 %v2164, %v2163
  %v2209 = vpack.c.b16 %v2166, %v2165
  %v2210 = vpack.c.b16 %v2168, %v2167
  %v2211 = vpack.c.b16 %v2170, %v2169
  %v2212 = vpack.c.b16 %v2172, %v2171
  %v2213 = vpack.c.b16 %v2174, %v2173
  %v2214 = vpack.c.b16 %v2176, %v2175
  %v2215 = vpack.c.b16 %v2178, %v2177
  %v2216 = vpack.c.b16 %v2180, %v2179
  %v2217 = vpack.c.b16 %v2182, %v2181
  %v2218 = vpack.c.b16 %v2184, %v2183
  %v2219 = vpack.c.b16 %v2186, %v2185
  %v2220 = vpack.c.b16 %v2188, %v2187
  %v2221 = vpack.c.b16 %v2190, %v2189
  %v2222 = vpack.c.b16 %v2192, %v2191
  %v2223 = vpack.c.b16 %v2194, %v2193
  %v2224 = vpack.c.b16 %v2196, %v2195
  %v2225 = vpack.c.b16 %v2198, %v2197
  %v2226 = vpack.c.b16 %v2200, %v2199
  %v2227 = vpack.c.b16 %v2202, %v2201
  %v2228 = vpack.c.b16 %v2204, %v2203
  %2253 = vmatprep.subr.bf16.mxu0 0
  %2254 = vmatpush1.bf16.msra.mxu0 %v2212
  %2255 = vmatprep.subr.bf16.mxu0 0
  %2256 = vmatpush1.bf16.msra.mxu0 %v2211
  %2257 = vmatprep.subr.bf16.mxu0 0
  %2258 = vmatpush1.bf16.msra.mxu0 %v2210
  %2259 = vmatprep.subr.bf16.mxu0 0
  %2260 = vmatpush1.bf16.msra.mxu0 %v2209
  %2261 = vmatprep.subr.bf16.mxu0 0
  %2262 = vmatpush1.bf16.msra.mxu0 %v2208
  %2263 = vmatprep.subr.bf16.mxu0 0
  %2264 = vmatpush1.bf16.msra.mxu0 %v2207
  %2265 = vmatprep.subr.bf16.mxu0 0
  %2266 = vmatpush1.bf16.msra.mxu0 %v2206
  %2267 = vmatprep.subr.bf16.mxu0 0
  %2268 = vmatpush1.bf16.msra.mxu0 %v2205
  %2269 = vmatprep.subr.bf16.mxu0 0
  %2270 = vmatpush2.bf16.msra.mxu0 %v2220
  %2271 = vmatprep.subr.bf16.mxu0 0
  %2272 = vmatpush2.bf16.msra.mxu0 %v2219
  %2273 = vmatprep.subr.bf16.mxu0 0
  %2274 = vmatpush2.bf16.msra.mxu0 %v2218
  %2275 = vmatprep.subr.bf16.mxu0 0
  %2276 = vmatpush2.bf16.msra.mxu0 %v2217
  %2277 = vmatprep.subr.bf16.mxu0 0
  %2278 = vmatpush2.bf16.msra.mxu0 %v2216
  %2279 = vmatprep.subr.bf16.mxu0 0
  %2280 = vmatpush2.bf16.msra.mxu0 %v2215
  %2281 = vmatprep.subr.bf16.mxu0 0
  %2282 = vmatpush2.bf16.msra.mxu0 %v2214
  %2283 = vmatprep.subr.bf16.mxu0 0
  %2284 = vmatpush2.bf16.msra.mxu0 %v2213
  %2285 = vmatprep.mubr.bf16.mxu0 %v2062
  %2286 = vmatmul.mubr.bf16.gmra.mxu0 %v2061
  %v2287 = vpop.f32.mrf.mxu0
  %v2288 = vadd.f32 %v1979, %v2287
  %v2289 = vpop.f32.mrf.mxu0
  %v2290 = vpop.f32.mrf.mxu0
  %v2291 = vadd.f32 %v1979, %v2290
  %v2292 = vpop.f32.mrf.mxu0
  %2293 = vmatprep.mubr.bf16.mxu0 %v2065
  %2294 = vmatmul.mubr.bf16.gmra.mxu0 %v2064
  %v2295 = vpop.f32.mrf.mxu0
  %v2296 = vadd.f32 %v1979, %v2295
  %v2297 = vpop.f32.mrf.mxu0
  %v2298 = vpop.f32.mrf.mxu0
  %v2299 = vadd.f32 %v1979, %v2298
  %v2300 = vpop.f32.mrf.mxu0
  %2301 = vmatprep.mubr.bf16.mxu0 %v2068
  %2302 = vmatmul.mubr.bf16.gmra.mxu0 %v2067
  %v2303 = vpop.f32.mrf.mxu0
  %v2304 = vadd.f32 %v1979, %v2303
  %v2305 = vpop.f32.mrf.mxu0
  %v2306 = vpop.f32.mrf.mxu0
  %v2307 = vadd.f32 %v1979, %v2306
  %v2308 = vpop.f32.mrf.mxu0
  %2309 = vmatprep.mubr.bf16.mxu0 %v2071
  %2310 = vmatmul.mubr.bf16.gmra.mxu0 %v2070
  %v2311 = vpop.f32.mrf.mxu0
  %v2312 = vadd.f32 %v1979, %v2311
  %v2313 = vpop.f32.mrf.mxu0
  %v2314 = vpop.f32.mrf.mxu0
  %v2315 = vadd.f32 %v1979, %v2314
  %v2316 = vpop.f32.mrf.mxu0
  %2317 = vmatprep.mubr.bf16.mxu0 %v2074
  %2318 = vmatmul.mubr.bf16.gmra.mxu0 %v2073
  %v2319 = vpop.f32.mrf.mxu0
  %v2320 = vadd.f32 %v1979, %v2319
  %v2321 = vpop.f32.mrf.mxu0
  %v2322 = vpop.f32.mrf.mxu0
  %v2323 = vadd.f32 %v1979, %v2322
  %v2324 = vpop.f32.mrf.mxu0
  %2325 = vmatprep.mubr.bf16.mxu0 %v2077
  %2326 = vmatmul.mubr.bf16.gmra.mxu0 %v2076
  %v2327 = vpop.f32.mrf.mxu0
  %v2328 = vadd.f32 %v1979, %v2327
  %v2329 = vpop.f32.mrf.mxu0
  %v2330 = vpop.f32.mrf.mxu0
  %v2331 = vadd.f32 %v1979, %v2330
  %v2332 = vpop.f32.mrf.mxu0
  %2333 = vmatprep.mubr.bf16.mxu0 %v2080
  %2334 = vmatmul.mubr.bf16.gmra.mxu0 %v2079
  %v2335 = vpop.f32.mrf.mxu0
  %v2336 = vadd.f32 %v1979, %v2335
  %v2337 = vpop.f32.mrf.mxu0
  %v2338 = vpop.f32.mrf.mxu0
  %v2339 = vadd.f32 %v1979, %v2338
  %v2340 = vpop.f32.mrf.mxu0
  %2341 = vmatprep.mubr.bf16.mxu0 %v2083
  %2342 = vmatmul.mubr.bf16.gmra.mxu0 %v2082
  %v2343 = vpop.f32.mrf.mxu0
  %v2344 = vadd.f32 %v1979, %v2343
  %v2345 = vpop.f32.mrf.mxu0
  %v2346 = vpop.f32.mrf.mxu0
  %v2347 = vadd.f32 %v1979, %v2346
  %v2348 = vpop.f32.mrf.mxu0
  %2349 = vdwg.mxu0
  %2350 = vmatprep.subr.bf16.mxu0 0
  %2351 = vmatpush1.bf16.msra.mxu0 %v2228
  %2352 = vmatprep.subr.bf16.mxu0 0
  %2353 = vmatpush1.bf16.msra.mxu0 %v2227
  %2354 = vmatprep.subr.bf16.mxu0 0
  %2355 = vmatpush1.bf16.msra.mxu0 %v2226
  %2356 = vmatprep.subr.bf16.mxu0 0
  %2357 = vmatpush1.bf16.msra.mxu0 %v2225
  %2358 = vmatprep.subr.bf16.mxu0 0
  %2359 = vmatpush1.bf16.msra.mxu0 %v2224
  %2360 = vmatprep.subr.bf16.mxu0 0
  %2361 = vmatpush1.bf16.msra.mxu0 %v2223
  %2362 = vmatprep.subr.bf16.mxu0 0
  %2363 = vmatpush1.bf16.msra.mxu0 %v2222
  %2364 = vmatprep.subr.bf16.mxu0 0
  %2365 = vmatpush1.bf16.msra.mxu0 %v2221
  %2366 = vmatprep.subr.bf16.mxu0 0
  %2367 = vmatpush2.bf16.msra.mxu0 0
  %2368 = vmatprep.subr.bf16.mxu0 0
  %2369 = vmatpush2.bf16.msra.mxu0 0
  %2370 = vmatprep.subr.bf16.mxu0 0
  %2371 = vmatpush2.bf16.msra.mxu0 0
  %2372 = vmatprep.subr.bf16.mxu0 0
  %2373 = vmatpush2.bf16.msra.mxu0 0
  %2374 = vmatprep.subr.bf16.mxu0 0
  %2375 = vmatpush2.bf16.msra.mxu0 0
  %2376 = vmatprep.subr.bf16.mxu0 0
  %2377 = vmatpush2.bf16.msra.mxu0 0
  %2378 = vmatprep.subr.bf16.mxu0 0
  %2379 = vmatpush2.bf16.msra.mxu0 0
  %2380 = vmatprep.subr.bf16.mxu0 0
  %2381 = vmatpush2.bf16.msra.mxu0 0
  %2382 = vmatprep.mubr.bf16.mxu0 0
  %2383 = vmatmul.mubr.bf16.gmra.mxu0 %v2063
  %v2384 = vpop.f32.mrf.mxu0
  %v2385 = vadd.f32 %v2288, %v2384
  %v2386 = vpop.f32.mrf.mxu0
  %v2387 = vpop.f32.mrf.mxu0
  %v2388 = vadd.f32 %v2291, %v2387
  %v2389 = vpop.f32.mrf.mxu0
  %2390 = vmatprep.mubr.bf16.mxu0 0
  %2391 = vmatmul.mubr.bf16.gmra.mxu0 %v2066
  %v2392 = vpop.f32.mrf.mxu0
  %v2393 = vadd.f32 %v2296, %v2392
  %v2394 = vpop.f32.mrf.mxu0
  %v2395 = vpop.f32.mrf.mxu0
  %v2396 = vadd.f32 %v2299, %v2395
  %v2397 = vpop.f32.mrf.mxu0
  %2398 = vmatprep.mubr.bf16.mxu0 0
  %2399 = vmatmul.mubr.bf16.gmra.mxu0 %v2069
  %v2400 = vpop.f32.mrf.mxu0
  %v2401 = vadd.f32 %v2304, %v2400
  %v2402 = vpop.f32.mrf.mxu0
  %v2403 = vpop.f32.mrf.mxu0
  %v2404 = vadd.f32 %v2307, %v2403
  %v2405 = vpop.f32.mrf.mxu0
  %2406 = vmatprep.mubr.bf16.mxu0 0
  %2407 = vmatmul.mubr.bf16.gmra.mxu0 %v2072
  %v2408 = vpop.f32.mrf.mxu0
  %v2409 = vadd.f32 %v2312, %v2408
  %v2410 = vpop.f32.mrf.mxu0
  %v2411 = vpop.f32.mrf.mxu0
  %v2412 = vadd.f32 %v2315, %v2411
  %v2413 = vpop.f32.mrf.mxu0
  %2414 = vmatprep.mubr.bf16.mxu0 0
  %2415 = vmatmul.mubr.bf16.gmra.mxu0 %v2075
  %v2416 = vpop.f32.mrf.mxu0
  %v2417 = vadd.f32 %v2320, %v2416
  %v2418 = vpop.f32.mrf.mxu0
  %v2419 = vpop.f32.mrf.mxu0
  %v2420 = vadd.f32 %v2323, %v2419
  %v2421 = vpop.f32.mrf.mxu0
  %2422 = vmatprep.mubr.bf16.mxu0 0
  %2423 = vmatmul.mubr.bf16.gmra.mxu0 %v2078
  %v2424 = vpop.f32.mrf.mxu0
  %v2425 = vadd.f32 %v2328, %v2424
  %v2426 = vpop.f32.mrf.mxu0
  %v2427 = vpop.f32.mrf.mxu0
  %v2428 = vadd.f32 %v2331, %v2427
  %v2429 = vpop.f32.mrf.mxu0
  %2430 = vmatprep.mubr.bf16.mxu0 0
  %2431 = vmatmul.mubr.bf16.gmra.mxu0 %v2081
  %v2432 = vpop.f32.mrf.mxu0
  %v2433 = vadd.f32 %v2336, %v2432
  %v2434 = vpop.f32.mrf.mxu0
  %v2435 = vpop.f32.mrf.mxu0
  %v2436 = vadd.f32 %v2339, %v2435
  %v2437 = vpop.f32.mrf.mxu0
  %2438 = vmatprep.mubr.bf16.mxu0 0
  %2439 = vmatmul.mubr.bf16.gmra.mxu0 %v2084
  %v2440 = vpop.f32.mrf.mxu0
  %v2441 = vadd.f32 %v2344, %v2440
  %v2442 = vpop.f32.mrf.mxu0
  %v2443 = vpop.f32.mrf.mxu0
  %v2444 = vadd.f32 %v2347, %v2443
  %v2445 = vpop.f32.mrf.mxu0
  %2446 = vdwg.mxu0
  %v2447 = vld [vmem:[%s6] sm:$0xff]
  %2448 = vmatprep.subr.mxu0 0.0
  %2449 = vmatpush1.msra.mxu0 %v2444
  %2450 = vmatprep.subr.mxu0 0.0
  %2451 = vmatpush1.msra.mxu0 %v2441
  %2452 = vmatprep.subr.mxu0 0.0
  %2453 = vmatpush1.msra.mxu0 %v2436
  %2454 = vmatprep.subr.mxu0 0.0
  %2455 = vmatpush1.msra.mxu0 %v2433
  %2456 = vmatprep.subr.mxu0 0.0
  %2457 = vmatpush1.msra.mxu0 %v2428
  %2458 = vmatprep.subr.mxu0 0.0
  %2459 = vmatpush1.msra.mxu0 %v2425
  %2460 = vmatprep.subr.mxu0 0.0
  %2461 = vmatpush1.msra.mxu0 %v2420
  %2462 = vmatprep.subr.mxu0 0.0
  %2463 = vmatpush1.msra.mxu0 %v2417
  %2464 = vmatprep.subr.mxu0 0.0
  %2465 = vmatpush1.msra.mxu0 %v2412
  %2466 = vmatprep.subr.mxu0 0.0
  %2467 = vmatpush1.msra.mxu0 %v2409
  %2468 = vmatprep.subr.mxu0 0.0
  %2469 = vmatpush1.msra.mxu0 %v2404
  %2470 = vmatprep.subr.mxu0 0.0
  %2471 = vmatpush1.msra.mxu0 %v2401
  %2472 = vmatprep.subr.mxu0 0.0
  %2473 = vmatpush1.msra.mxu0 %v2396
  %2474 = vmatprep.subr.mxu0 0.0
  %2475 = vmatpush1.msra.mxu0 %v2393
  %2476 = vmatprep.subr.mxu0 0.0
  %2477 = vmatpush1.msra.mxu0 %v2388
  %2478 = vmatprep.subr.mxu0 0.0
  %2479 = vmatpush1.msra.mxu0 %v2385
  %2480 = vmatprep.subr.mxu0 0.0
  %2481 = vmatpush2.msra.mxu0 0.0
  %2482 = vmatprep.subr.mxu0 0.0
  %2483 = vmatpush2.msra.mxu0 0.0
  %2484 = vmatprep.subr.mxu0 0.0
  %2485 = vmatpush2.msra.mxu0 0.0
  %2486 = vmatprep.subr.mxu0 0.0
  %2487 = vmatpush2.msra.mxu0 0.0
  %2488 = vmatprep.subr.mxu0 0.0
  %2489 = vmatpush2.msra.mxu0 0.0
  %2490 = vmatprep.subr.mxu0 0.0
  %2491 = vmatpush2.msra.mxu0 0.0
  %2492 = vmatprep.subr.mxu0 0.0
  %2493 = vmatpush2.msra.mxu0 0.0
  %2494 = vmatprep.subr.mxu0 0.0
  %2495 = vmatpush2.msra.mxu0 0.0
  %2496 = vmatprep.subr.mxu0 0.0
  %2497 = vmatpush2.msra.mxu0 0.0
  %2498 = vmatprep.subr.mxu0 0.0
  %2499 = vmatpush2.msra.mxu0 0.0
  %2500 = vmatprep.subr.mxu0 0.0
  %2501 = vmatpush2.msra.mxu0 0.0
  %2502 = vmatprep.subr.mxu0 0.0
  %2503 = vmatpush2.msra.mxu0 0.0
  %2504 = vmatprep.subr.mxu0 0.0
  %2505 = vmatpush2.msra.mxu0 0.0
  %2506 = vmatprep.subr.mxu0 0.0
  %2507 = vmatpush2.msra.mxu0 0.0
  %2508 = vmatprep.subr.mxu0 0.0
  %2509 = vmatpush2.msra.mxu0 0.0
  %2510 = vmatprep.subr.mxu0 0.0
  %2511 = vmatpush2.msra.mxu0 0.0
  %2512 = vmatprep.mubr.f32.mxu0 0.0
  %2513 = vmatmul.mubr.f32.gmra.mxu0 %v2447
  %v2514 = vpop.f32.mrf.mxu0
  %v2515 = vadd.f32 0.0, %v2514
  %v2516 = vpop.f32.mrf.mxu0
  %2517 = vdwg.mxu0
  %v2518 = vpack.c.bf16 %v2515, %v2515
  %v2519 = vld [vmem:[%s7] sm:$0xf]
  %v2520 = vld [vmem:[%s7 + $0x4] sm:$0xf]
  %v2521 = vld [vmem:[%s7 + $0x8] sm:$0xf]
  %v2522 = vld [vmem:[%s7 + $0xc] sm:$0xf]
  %v2523 = vld [vmem:[%s7 + $0x10] sm:$0xf]
  %v2524 = vld [vmem:[%s7 + $0x14] sm:$0xf]
  %v2525 = vld [vmem:[%s7 + $0x18] sm:$0xf]
  %v2526 = vld [vmem:[%s7 + $0x1c] sm:$0xf]
  %v2527 = vld [vmem:[%s7 + $0x20] sm:$0xf]
  %v2528 = vld [vmem:[%s7 + $0x24] sm:$0xf]
  %v2529 = vld [vmem:[%s7 + $0x28] sm:$0xf]
  %v2530 = vld [vmem:[%s7 + $0x2c] sm:$0xf]
  %v2531 = vld [vmem:[%s7 + $0x30] sm:$0xf]
  %v2532 = vld [vmem:[%s7 + $0x34] sm:$0xf]
  %v2533 = vld [vmem:[%s7 + $0x38] sm:$0xf]
  %v2534 = vld [vmem:[%s7 + $0x3c] sm:$0xf]
  %v2535 = vld [vmem:[%s8] sm:$0x1]
  %v2537 = vlaneseq
  %v2538 = vshrl.u32 %v2537, 7
  %v2539 = vsub.s32 0, %v2538
  %v2540 = vrot.slane %v2535, %v2539
  %v2558 = vunpack.c.l.b16 %v2519
  %v2559 = vunpack.c.l.b16 %v2520
  %v2560 = vunpack.c.l.b16 %v2521
  %v2561 = vunpack.c.l.b16 %v2522
  %v2562 = vunpack.c.l.b16 %v2523
  %v2563 = vunpack.c.l.b16 %v2524
  %v2564 = vunpack.c.l.b16 %v2525
  %v2565 = vunpack.c.l.b16 %v2526
  %v2566 = vunpack.c.l.b16 %v2527
  %v2567 = vunpack.c.l.b16 %v2528
  %v2568 = vunpack.c.l.b16 %v2529
  %v2569 = vunpack.c.l.b16 %v2530
  %v2570 = vunpack.c.l.b16 %v2531
  %v2571 = vunpack.c.l.b16 %v2532
  %v2572 = vunpack.c.l.b16 %v2533
  %v2573 = vunpack.c.l.b16 %v2534
  %v2574 = vpack.c.b16 %v2559, %v2558
  %v2575 = vpack.c.b16 %v2561, %v2560
  %v2576 = vpack.c.b16 %v2563, %v2562
  %v2577 = vpack.c.b16 %v2565, %v2564
  %v2578 = vpack.c.b16 %v2567, %v2566
  %v2579 = vpack.c.b16 %v2569, %v2568
  %v2580 = vpack.c.b16 %v2571, %v2570
  %v2581 = vpack.c.b16 %v2573, %v2572
  %2590 = vmatprep.subr.bf16.mxu0 0
  %2591 = vmatpush1.bf16.msra.mxu0 %v2581
  %2592 = vmatprep.subr.bf16.mxu0 0
  %2593 = vmatpush1.bf16.msra.mxu0 %v2580
  %2594 = vmatprep.subr.bf16.mxu0 0
  %2595 = vmatpush1.bf16.msra.mxu0 %v2579
  %2596 = vmatprep.subr.bf16.mxu0 0
  %2597 = vmatpush1.bf16.msra.mxu0 %v2578
  %2598 = vmatprep.subr.bf16.mxu0 0
  %2599 = vmatpush1.bf16.msra.mxu0 %v2577
  %2600 = vmatprep.subr.bf16.mxu0 0
  %2601 = vmatpush1.bf16.msra.mxu0 %v2576
  %2602 = vmatprep.subr.bf16.mxu0 0
  %2603 = vmatpush1.bf16.msra.mxu0 %v2575
  %2604 = vmatprep.subr.bf16.mxu0 0
  %2605 = vmatpush1.bf16.msra.mxu0 %v2574
  %2606 = vmatprep.subr.bf16.mxu0 0
  %2607 = vmatpush2.bf16.msra.mxu0 0
  %2608 = vmatprep.subr.bf16.mxu0 0
  %2609 = vmatpush2.bf16.msra.mxu0 0
  %2610 = vmatprep.subr.bf16.mxu0 0
  %2611 = vmatpush2.bf16.msra.mxu0 0
  %2612 = vmatprep.subr.bf16.mxu0 0
  %2613 = vmatpush2.bf16.msra.mxu0 0
  %2614 = vmatprep.subr.bf16.mxu0 0
  %2615 = vmatpush2.bf16.msra.mxu0 0
  %2616 = vmatprep.subr.bf16.mxu0 0
  %2617 = vmatpush2.bf16.msra.mxu0 0
  %2618 = vmatprep.subr.bf16.mxu0 0
  %2619 = vmatpush2.bf16.msra.mxu0 0
  %2620 = vmatprep.subr.bf16.mxu0 0
  %2621 = vmatpush2.bf16.msra.mxu0 0
  %2622 = vmatprep.mubr.bf16.mxu0 0
  %2623 = vmatmul.mubr.bf16.gmra.mxu0 %v2518
  %v2624 = vpop.f32.mrf.mxu0
  %v2625 = vadd.f32 %v2540, %v2624
  %v2626 = vpop.f32.mrf.mxu0
  %v2627 = vpop.f32.mrf.mxu0
  %v2628 = vpop.f32.mrf.mxu0
  %2629 = vdwg.mxu0
  %2630 = vst [vmem:[%s9] sm:$0xff] %v2625
  // Predicated region
  $region38: #{rgcn_forward.1} parent=0 // pred_check
    _
  $region39: #{rgcn_forward.1} parent=0 // pred_check_branch
    %2632 = sbr.rel (0) target = $region41
  $region40: #{rgcn_forward.1} parent=0 // pred_region
    _
  $region41: #{rgcn_forward.1} parent=0 // pred_fallthru
    _
  // Predicated region
  $region42: #{rgcn_forward.1} parent=0 // pred_check
    _
  $region43: #{rgcn_forward.1} parent=0 // pred_check_branch
    %2634 = sbr.rel (0) target = $region45
  $region44: #{rgcn_forward.1} parent=0 // pred_region
    _
  $region45: #{rgcn_forward.1} parent=0 // pred_fallthru
    _

</llo_original>
